<compile_context>
chip_gen: v5e
topology: v5e:2x2
jax: 0.10.0
libtpu: 0.0.40
codegen_flags: <defaults>
</compile_context>

<pallas_src>
import jax
import jax.numpy as jnp
from jax.experimental import pallas as pl
from jax.experimental.pallas import tpu as pltpu


_H1, _H2, _OUT = 512, 128, 64
_OUT_PAD = 128            # lane-dense output width: branch1 | branch2
_TM_MAX = 1024            # batch-tile rows per branch per grid step
_MIN_GRID_STEPS = 2       # keep >=2 steps so v7x's two TCs both get work


def _round_up(x, m):
    return (x + m - 1) // m * m


def _siamese_fused_kernel(x1_ref, x2_ref, w1_ref, b1_ref, w2_ref, b2_ref,
                          w3_ref, b3_ref, w4l_ref, w4r_ref, b4_ref, o_ref):
    """Both siamese branches, fused.

    x1_ref: (TM, D1p) f32, x2_ref: (TM, D2p) f32 (cast to bf16 on-chip)
    w1/w2/w3: bf16 pre-transposed; w4l/w4r: (128,128) bf16 lane-packed fc4
    b*: (1, D_out) f32
    o_ref: (TM, 128) f32 -- branch1 in lanes [0,64), branch2 in [64,128)
    """
    x1 = x1_ref[...].astype(jnp.bfloat16)
    x2 = x2_ref[...].astype(jnp.bfloat16)

    # Branch-specific fc1 / fc2 (bf16 x bf16 -> f32 acc), bias+ReLU in f32.
    h1a = jnp.dot(x1, w1_ref[...], preferred_element_type=jnp.float32)
    h1a = jnp.maximum(h1a + b1_ref[...], 0.0).astype(jnp.bfloat16)
    h1b = jnp.dot(x2, w2_ref[...], preferred_element_type=jnp.float32)
    h1b = jnp.maximum(h1b + b2_ref[...], 0.0).astype(jnp.bfloat16)

    # Shared fc3 run once per branch (w3 is resident in VMEM; avoids the
    # row-stack concat copy of the previous version).
    h2a = jnp.dot(h1a, w3_ref[...], preferred_element_type=jnp.float32)
    h2a = jnp.maximum(h2a + b3_ref[...], 0.0).astype(jnp.bfloat16)
    h2b = jnp.dot(h1b, w3_ref[...], preferred_element_type=jnp.float32)
    h2b = jnp.maximum(h2b + b3_ref[...], 0.0).astype(jnp.bfloat16)

    # Lane-packed fc4: w4L maps branch-1 output to lanes [0,64), w4R maps
    # branch-2 output to lanes [64,128). Output is lane-dense, no concat.
    o = jnp.dot(h2a, w4l_ref[...], preferred_element_type=jnp.float32)
    o = o + jnp.dot(h2b, w4r_ref[...], preferred_element_type=jnp.float32)
    o_ref[...] = (o + b4_ref[...]).astype(o_ref.dtype)


def init_params(key, pair_one_input_dim, pair_two_input_dim):
    """PyTorch nn.Linear-style init: U[-1/sqrt(fan_in), 1/sqrt(fan_in)]."""
    def linear(k, fan_in, fan_out):
        kw, kb = jax.random.split(k)
        bound = 1.0 / jnp.sqrt(fan_in)
        w = jax.random.uniform(kw, (fan_in, fan_out), jnp.float32, -bound, bound)
        b = jax.random.uniform(kb, (1, fan_out), jnp.float32, -bound, bound)
        return w, b

    k1, k2, k3, k4 = jax.random.split(key, 4)
    params = {}
    params["fc1_w"], params["fc1_b"] = linear(k1, pair_one_input_dim, _H1)
    params["fc2_w"], params["fc2_b"] = linear(k2, pair_two_input_dim, _H1)
    params["fc3_w"], params["fc3_b"] = linear(k3, _H1, _H2)
    params["fc4_w"], params["fc4_b"] = linear(k4, _H2, _OUT)
    return params


def prepare_params(params):
    """One-time pad + bf16 cast + fc4 lane-packing (hoisted out of forward)."""
    d1 = params["fc1_w"].shape[0]
    d2 = params["fc2_w"].shape[0]
    d1p, d2p = _round_up(d1, 128), _round_up(d2, 128)

    def pad2(a, rows, cols):
        if a.shape == (rows, cols):
            return a
        return jnp.pad(a, ((0, rows - a.shape[0]), (0, cols - a.shape[1])))

    w4 = params["fc4_w"]                                          # (128, 64)
    w4l = jnp.zeros((_H2, _OUT_PAD), jnp.float32).at[:, :_OUT].set(w4)
    w4r = jnp.zeros((_H2, _OUT_PAD), jnp.float32).at[:, _OUT:].set(w4)
    b4p = jnp.concatenate([params["fc4_b"], params["fc4_b"]], axis=1)

    return {
        "d1": d1, "d2": d2, "d1p": d1p, "d2p": d2p,
        "w1": pad2(params["fc1_w"], d1p, _H1).astype(jnp.bfloat16),
        "w2": pad2(params["fc2_w"], d2p, _H1).astype(jnp.bfloat16),
        "w3": params["fc3_w"].astype(jnp.bfloat16),
        "w4l": w4l.astype(jnp.bfloat16),
        "w4r": w4r.astype(jnp.bfloat16),
        "b1": params["fc1_b"].astype(jnp.float32),
        "b2": params["fc2_b"].astype(jnp.float32),
        "b3": params["fc3_b"].astype(jnp.float32),
        "b4": b4p.astype(jnp.float32),
    }


def siamese_forward(prepared, input1, input2=None):
    """Matches SiameseNetwork_v1.forward semantics (prepared params)."""
    B = input1.shape[0]
    x1 = input1.reshape(B, -1).astype(jnp.float32)
    if input2 is None:
        # Branch-2 runs on zeros; its output is discarded (tiny extra work).
        x2 = jnp.zeros((B, prepared["d2"]), jnp.float32)
    else:
        x2 = input2.reshape(B, -1).astype(jnp.float32)

    d1p, d2p = prepared["d1p"], prepared["d2p"]

    # Large batch tile to amortize per-step overhead, but keep >=2 grid steps
    # (when the batch allows) so v7x's two TensorCores both get work.
    tm = min(_TM_MAX, _round_up(max(1, pl.cdiv(B, _MIN_GRID_STEPS)), 8))
    b_pad = _round_up(B, tm)
    grid = (b_pad // tm,)

    def pad2(a, rows, cols):
        if a.shape == (rows, cols):
            return a
        return jnp.pad(a, ((0, rows - a.shape[0]), (0, cols - a.shape[1])))

    # Inputs stay f32 (no wrapper bf16 pass); kernel casts on the VPU.
    x1p = pad2(x1, b_pad, d1p)
    x2p = pad2(x2, b_pad, d2p)

    def resident(shape):
        # Constant index_map across the grid -> single-buffer to save VMEM.
        return pl.BlockSpec(shape, lambda i: (0, 0),
                            pipeline_mode=pl.Buffered(1))

    out = pl.pallas_call(
        _siamese_fused_kernel,
        out_shape=jax.ShapeDtypeStruct((b_pad, _OUT_PAD), jnp.float32),
        grid_spec=pltpu.PrefetchScalarGridSpec(
            num_scalar_prefetch=0,
            grid=grid,
            in_specs=[
                pl.BlockSpec((tm, d1p), lambda i: (i, 0)),
                pl.BlockSpec((tm, d2p), lambda i: (i, 0)),
                resident((d1p, _H1)),
                resident((1, _H1)),
                resident((d2p, _H1)),
                resident((1, _H1)),
                resident((_H1, _H2)),
                resident((1, _H2)),
                resident((_H2, _OUT_PAD)),
                resident((_H2, _OUT_PAD)),
                resident((1, _OUT_PAD)),
            ],
            out_specs=pl.BlockSpec((tm, _OUT_PAD), lambda i: (i, 0)),
        ),
        compiler_params=pltpu.CompilerParams(
            dimension_semantics=("parallel",),   # shard batch tiles across TCs
            vmem_limit_bytes=32 << 20,
        ),
    )(x1p, x2p, prepared["w1"], prepared["b1"], prepared["w2"], prepared["b2"],
      prepared["w3"], prepared["b3"], prepared["w4l"], prepared["w4r"],
      prepared["b4"])

    out1 = out[:B, :_OUT]
    if input2 is None:
        return out1
    return out1, out[:B, _OUT:]


def _reference_forward(params, input1, input2):
    """Pure-JAX reference using the same bf16 casts as the kernel."""
    def bcast(a):
        return a.astype(jnp.bfloat16).astype(jnp.float32)

    def branch(x, w1, b1):
        x = bcast(x.reshape(x.shape[0], -1))
        h = jnp.maximum(x @ bcast(w1) + b1, 0.0)
        h = jnp.maximum(bcast(h) @ bcast(params["fc3_w"]) + params["fc3_b"], 0.0)
        return bcast(h) @ bcast(params["fc4_w"]) + params["fc4_b"]

    return (branch(input1, params["fc1_w"], params["fc1_b"]),
            branch(input2, params["fc2_w"], params["fc2_b"]))


if __name__ == "__main__":
    key = jax.random.PRNGKey(0)
    k_params, k_x1, k_x2 = jax.random.split(key, 3)

    # Small shapes: input1 is image-like (B, C, H, W) flattened -> 256 features,
    # input2 is a flat vector of 128 features.
    B = 2
    pair_one_input_dim = 4 * 8 * 8   # 256
    pair_two_input_dim = 128

    params = init_params(k_params, pair_one_input_dim, pair_two_input_dim)
    prepared = prepare_params(params)

    input1 = jax.random.normal(k_x1, (B, 4, 8, 8), jnp.float32)
    input2 = jax.random.normal(k_x2, (B, pair_two_input_dim), jnp.float32)

    out1, out2 = siamese_forward(prepared, input1, input2)
    out1 = jax.block_until_ready(out1)
    out2 = jax.block_until_ready(out2)

    ref1, ref2 = _reference_forward(params, input1, input2)
    assert out1.shape == (B, 64) and out2.shape == (B, 64)
    assert jnp.allclose(out1, ref1, atol=1e-2, rtol=1e-2)
    assert jnp.allclose(out2, ref2, atol=1e-2, rtol=1e-2)

    print("KERNEL_OK")
</pallas_src>

<mosaic_0001>
module attributes {stable_mosaic.version = 11 : i64} {
  func.func @_siamese_fused_kernel(%arg0: i32, %arg1: memref<8x256xf32, #tpu.memory_space<vmem>>, %arg2: memref<8x128xf32, #tpu.memory_space<vmem>>, %arg3: memref<256x512xbf16, #tpu.memory_space<vmem>>, %arg4: memref<1x512xf32, #tpu.memory_space<vmem>>, %arg5: memref<128x512xbf16, #tpu.memory_space<vmem>>, %arg6: memref<1x512xf32, #tpu.memory_space<vmem>>, %arg7: memref<512x128xbf16, #tpu.memory_space<vmem>>, %arg8: memref<1x128xf32, #tpu.memory_space<vmem>>, %arg9: memref<128x128xbf16, #tpu.memory_space<vmem>>, %arg10: memref<128x128xbf16, #tpu.memory_space<vmem>>, %arg11: memref<1x128xf32, #tpu.memory_space<vmem>>, %arg12: memref<8x128xf32, #tpu.memory_space<vmem>>) attributes {dimension_semantics = [#tpu.dimension_semantics<parallel>], iteration_bounds = array<i64: 1>, scalar_prefetch = 0 : i64, scratch_operands = 0 : i64, tpu.core_type = #tpu.core_type<tc>, window_params = [{transform_indices = @transform_0, window_bounds = array<i64: 8, 256>}, {transform_indices = @transform_1, window_bounds = array<i64: 8, 128>}, {pipeline_mode = #tpu.pipeline_mode<synchronous>, transform_indices = @transform_2, window_bounds = array<i64: 256, 512>}, {pipeline_mode = #tpu.pipeline_mode<synchronous>, transform_indices = @transform_3, window_bounds = array<i64: 1, 512>}, {pipeline_mode = #tpu.pipeline_mode<synchronous>, transform_indices = @transform_4, window_bounds = array<i64: 128, 512>}, {pipeline_mode = #tpu.pipeline_mode<synchronous>, transform_indices = @transform_5, window_bounds = array<i64: 1, 512>}, {pipeline_mode = #tpu.pipeline_mode<synchronous>, transform_indices = @transform_6, window_bounds = array<i64: 512, 128>}, {pipeline_mode = #tpu.pipeline_mode<synchronous>, transform_indices = @transform_7, window_bounds = array<i64: 1, 128>}, {pipeline_mode = #tpu.pipeline_mode<synchronous>, transform_indices = @transform_8, window_bounds = array<i64: 128, 128>}, {pipeline_mode = #tpu.pipeline_mode<synchronous>, transform_indices = @transform_9, window_bounds = array<i64: 128, 128>}, {pipeline_mode = #tpu.pipeline_mode<synchronous>, transform_indices = @transform_10, window_bounds = array<i64: 1, 128>}, {transform_indices = @transform_11, window_bounds = array<i64: 8, 128>}]} {
    %c0 = arith.constant 0 : index
    %c0_0 = arith.constant 0 : index
    %0 = vector.load %arg1[%c0, %c0_0] : memref<8x256xf32, #tpu.memory_space<vmem>>, vector<8x256xf32>
    %1 = arith.truncf %0 : vector<8x256xf32> to vector<8x256xbf16>
    %c0_1 = arith.constant 0 : index
    %c0_2 = arith.constant 0 : index
    %2 = vector.load %arg2[%c0_1, %c0_2] : memref<8x128xf32, #tpu.memory_space<vmem>>, vector<8x128xf32>
    %3 = arith.truncf %2 : vector<8x128xf32> to vector<8x128xbf16>
    %c0_3 = arith.constant 0 : index
    %c0_4 = arith.constant 0 : index
    %4 = vector.load %arg3[%c0_3, %c0_4] : memref<256x512xbf16, #tpu.memory_space<vmem>>, vector<256x512xbf16>
    %cst = arith.constant dense<0.000000e+00> : vector<8x512xf32>
    %5 = tpu.matmul %1, %4, %cst {dimension_numbers = #tpu.dot_dimension_numbers<[1], [0], [0], [1], [0, 0, 1, 1], [], []>} : vector<8x256xbf16>, vector<256x512xbf16>, vector<8x512xf32> -> vector<8x512xf32>
    %c0_5 = arith.constant 0 : index
    %c0_6 = arith.constant 0 : index
    %6 = vector.load %arg4[%c0_5, %c0_6] : memref<1x512xf32, #tpu.memory_space<vmem>>, vector<1x512xf32>
    %7 = vector.broadcast %6 : vector<1x512xf32> to vector<8x512xf32>
    %8 = arith.addf %5, %7 : vector<8x512xf32>
    %cst_7 = arith.constant 0.000000e+00 : f32
    %9 = vector.broadcast %cst_7 : f32 to vector<8x512xf32>
    %10 = arith.maximumf %8, %9 : vector<8x512xf32>
    %11 = arith.truncf %10 : vector<8x512xf32> to vector<8x512xbf16>
    %c0_8 = arith.constant 0 : index
    %c0_9 = arith.constant 0 : index
    %12 = vector.load %arg5[%c0_8, %c0_9] : memref<128x512xbf16, #tpu.memory_space<vmem>>, vector<128x512xbf16>
    %cst_10 = arith.constant dense<0.000000e+00> : vector<8x512xf32>
    %13 = tpu.matmul %3, %12, %cst_10 {dimension_numbers = #tpu.dot_dimension_numbers<[1], [0], [0], [1], [0, 0, 1, 1], [], []>} : vector<8x128xbf16>, vector<128x512xbf16>, vector<8x512xf32> -> vector<8x512xf32>
    %c0_11 = arith.constant 0 : index
    %c0_12 = arith.constant 0 : index
    %14 = vector.load %arg6[%c0_11, %c0_12] : memref<1x512xf32, #tpu.memory_space<vmem>>, vector<1x512xf32>
    %15 = vector.broadcast %14 : vector<1x512xf32> to vector<8x512xf32>
    %16 = arith.addf %13, %15 : vector<8x512xf32>
    %cst_13 = arith.constant 0.000000e+00 : f32
    %17 = vector.broadcast %cst_13 : f32 to vector<8x512xf32>
    %18 = arith.maximumf %16, %17 : vector<8x512xf32>
    %19 = arith.truncf %18 : vector<8x512xf32> to vector<8x512xbf16>
    %c0_14 = arith.constant 0 : index
    %c0_15 = arith.constant 0 : index
    %20 = vector.load %arg7[%c0_14, %c0_15] : memref<512x128xbf16, #tpu.memory_space<vmem>>, vector<512x128xbf16>
    %cst_16 = arith.constant dense<0.000000e+00> : vector<8x128xf32>
    %21 = tpu.matmul %11, %20, %cst_16 {dimension_numbers = #tpu.dot_dimension_numbers<[1], [0], [0], [1], [0, 0, 1, 1], [], []>} : vector<8x512xbf16>, vector<512x128xbf16>, vector<8x128xf32> -> vector<8x128xf32>
    %c0_17 = arith.constant 0 : index
    %c0_18 = arith.constant 0 : index
    %22 = vector.load %arg8[%c0_17, %c0_18] : memref<1x128xf32, #tpu.memory_space<vmem>>, vector<1x128xf32>
    %23 = vector.broadcast %22 : vector<1x128xf32> to vector<8x128xf32>
    %24 = arith.addf %21, %23 : vector<8x128xf32>
    %cst_19 = arith.constant 0.000000e+00 : f32
    %25 = vector.broadcast %cst_19 : f32 to vector<8x128xf32>
    %26 = arith.maximumf %24, %25 : vector<8x128xf32>
    %27 = arith.truncf %26 : vector<8x128xf32> to vector<8x128xbf16>
    %c0_20 = arith.constant 0 : index
    %c0_21 = arith.constant 0 : index
    %28 = vector.load %arg7[%c0_20, %c0_21] : memref<512x128xbf16, #tpu.memory_space<vmem>>, vector<512x128xbf16>
    %cst_22 = arith.constant dense<0.000000e+00> : vector<8x128xf32>
    %29 = tpu.matmul %19, %28, %cst_22 {dimension_numbers = #tpu.dot_dimension_numbers<[1], [0], [0], [1], [0, 0, 1, 1], [], []>} : vector<8x512xbf16>, vector<512x128xbf16>, vector<8x128xf32> -> vector<8x128xf32>
    %c0_23 = arith.constant 0 : index
    %c0_24 = arith.constant 0 : index
    %30 = vector.load %arg8[%c0_23, %c0_24] : memref<1x128xf32, #tpu.memory_space<vmem>>, vector<1x128xf32>
    %31 = vector.broadcast %30 : vector<1x128xf32> to vector<8x128xf32>
    %32 = arith.addf %29, %31 : vector<8x128xf32>
    %cst_25 = arith.constant 0.000000e+00 : f32
    %33 = vector.broadcast %cst_25 : f32 to vector<8x128xf32>
    %34 = arith.maximumf %32, %33 : vector<8x128xf32>
    %35 = arith.truncf %34 : vector<8x128xf32> to vector<8x128xbf16>
    %c0_26 = arith.constant 0 : index
    %c0_27 = arith.constant 0 : index
    %36 = vector.load %arg9[%c0_26, %c0_27] : memref<128x128xbf16, #tpu.memory_space<vmem>>, vector<128x128xbf16>
    %cst_28 = arith.constant dense<0.000000e+00> : vector<8x128xf32>
    %37 = tpu.matmul %27, %36, %cst_28 {dimension_numbers = #tpu.dot_dimension_numbers<[1], [0], [0], [1], [0, 0, 1, 1], [], []>} : vector<8x128xbf16>, vector<128x128xbf16>, vector<8x128xf32> -> vector<8x128xf32>
    %c0_29 = arith.constant 0 : index
    %c0_30 = arith.constant 0 : index
    %38 = vector.load %arg10[%c0_29, %c0_30] : memref<128x128xbf16, #tpu.memory_space<vmem>>, vector<128x128xbf16>
    %cst_31 = arith.constant dense<0.000000e+00> : vector<8x128xf32>
    %39 = tpu.matmul %35, %38, %cst_31 {dimension_numbers = #tpu.dot_dimension_numbers<[1], [0], [0], [1], [0, 0, 1, 1], [], []>} : vector<8x128xbf16>, vector<128x128xbf16>, vector<8x128xf32> -> vector<8x128xf32>
    %40 = arith.addf %37, %39 : vector<8x128xf32>
    %c0_32 = arith.constant 0 : index
    %c0_33 = arith.constant 0 : index
    %41 = vector.load %arg11[%c0_32, %c0_33] : memref<1x128xf32, #tpu.memory_space<vmem>>, vector<1x128xf32>
    %42 = vector.broadcast %41 : vector<1x128xf32> to vector<8x128xf32>
    %43 = arith.addf %40, %42 : vector<8x128xf32>
    %c0_34 = arith.constant 0 : index
    %c0_35 = arith.constant 0 : index
    %44 = vector.load %arg12[%c0_34, %c0_35] : memref<8x128xf32, #tpu.memory_space<vmem>>, vector<8x128xf32>
    tpu.vector_store %arg12[%c0_34, %c0_35], %43 {strides = array<i32>} : memref<8x128xf32, #tpu.memory_space<vmem>>, vector<8x128xf32>,
    return
  }
  func.func @transform_0(%arg0: i32) -> (i32, i32) {
    %c0_i32 = arith.constant 0 : i32
    %c0_i32_0 = arith.constant 0 : i32
    return %arg0, %c0_i32 : i32, i32
  }
  func.func @transform_1(%arg0: i32) -> (i32, i32) {
    %c0_i32 = arith.constant 0 : i32
    %c0_i32_0 = arith.constant 0 : i32
    return %arg0, %c0_i32 : i32, i32
  }
  func.func @transform_2(%arg0: i32) -> (i32, i32) {
    %c0_i32 = arith.constant 0 : i32
    %c0_i32_0 = arith.constant 0 : i32
    %c0_i32_1 = arith.constant 0 : i32
    return %c0_i32, %c0_i32_0 : i32, i32
  }
  func.func @transform_3(%arg0: i32) -> (i32, i32) {
    %c0_i32 = arith.constant 0 : i32
    %c0_i32_0 = arith.constant 0 : i32
    %c0_i32_1 = arith.constant 0 : i32
    return %c0_i32, %c0_i32_0 : i32, i32
  }
  func.func @transform_4(%arg0: i32) -> (i32, i32) {
    %c0_i32 = arith.constant 0 : i32
    %c0_i32_0 = arith.constant 0 : i32
    %c0_i32_1 = arith.constant 0 : i32
    return %c0_i32, %c0_i32_0 : i32, i32
  }
  func.func @transform_5(%arg0: i32) -> (i32, i32) {
    %c0_i32 = arith.constant 0 : i32
    %c0_i32_0 = arith.constant 0 : i32
    %c0_i32_1 = arith.constant 0 : i32
    return %c0_i32, %c0_i32_0 : i32, i32
  }
  func.func @transform_6(%arg0: i32) -> (i32, i32) {
    %c0_i32 = arith.constant 0 : i32
    %c0_i32_0 = arith.constant 0 : i32
    %c0_i32_1 = arith.constant 0 : i32
    return %c0_i32, %c0_i32_0 : i32, i32
  }
  func.func @transform_7(%arg0: i32) -> (i32, i32) {
    %c0_i32 = arith.constant 0 : i32
    %c0_i32_0 = arith.constant 0 : i32
    %c0_i32_1 = arith.constant 0 : i32
    return %c0_i32, %c0_i32_0 : i32, i32
  }
  func.func @transform_8(%arg0: i32) -> (i32, i32) {
    %c0_i32 = arith.constant 0 : i32
    %c0_i32_0 = arith.constant 0 : i32
    %c0_i32_1 = arith.constant 0 : i32
    return %c0_i32, %c0_i32_0 : i32, i32
  }
  func.func @transform_9(%arg0: i32) -> (i32, i32) {
    %c0_i32 = arith.constant 0 : i32
    %c0_i32_0 = arith.constant 0 : i32
    %c0_i32_1 = arith.constant 0 : i32
    return %c0_i32, %c0_i32_0 : i32, i32
  }
  func.func @transform_10(%arg0: i32) -> (i32, i32) {
    %c0_i32 = arith.constant 0 : i32
    %c0_i32_0 = arith.constant 0 : i32
    %c0_i32_1 = arith.constant 0 : i32
    return %c0_i32, %c0_i32_0 : i32, i32
  }
  func.func @transform_11(%arg0: i32) -> (i32, i32) {
    %c0_i32 = arith.constant 0 : i32
    %c0_i32_0 = arith.constant 0 : i32
    return %arg0, %c0_i32 : i32, i32
  }
}

</mosaic_0001>

<llo_original>
// kernel: tpu_custom_call.1
$region0: #{tpu_custom_call.1}
  #allocation0 [shape = 'u32[]', space=smem, size = 0x4, offset = 0x4, fixed_abs, tag = 'smem constant byte address 0x4 - core index']
  #allocation1 [shape = 'u32[72,128]{1,0:T(1,128)}', space=vmem, size = 0x9000, scoped, tag = 'internal scratch']
  %s0 = inlined_call_operand.hbm [shape: f32[8,256], index: 0, kind: input, shape index: {}]
  %s1 = inlined_call_operand.hbm [shape: f32[8,128], index: 1, kind: input, shape index: {}]
  %s2 = inlined_call_operand.hbm [shape: bf16[256,512], index: 2, kind: input, shape index: {}]
  %s3 = inlined_call_operand.hbm [shape: f32[1,512], index: 3, kind: input, shape index: {}]
  %s4 = inlined_call_operand.hbm [shape: bf16[128,512], index: 4, kind: input, shape index: {}]
  %s5 = inlined_call_operand.vmem [shape: f32[1,512], index: 5, kind: input, shape index: {}]
  %s6 = inlined_call_operand.hbm [shape: bf16[512,128], index: 6, kind: input, shape index: {}]
  %s7 = inlined_call_operand.vmem [shape: f32[1,128], index: 7, kind: input, shape index: {}]
  %s8 = inlined_call_operand.hbm [shape: bf16[128,128], index: 8, kind: input, shape index: {}]
  %s9 = inlined_call_operand.hbm [shape: bf16[128,128], index: 9, kind: input, shape index: {}]
  %s10 = inlined_call_operand.vmem [shape: f32[1,128], index: 10, kind: input, shape index: {}]
  %s11 = inlined_call_operand.hbm [shape: f32[8,128], index: 11, kind: output, shape index: {}]
  %s12 = sld [smem:[#allocation0]]
  $region86: #{tpu_custom_call.1} parent=0
    _
  %s14 = ssub.s32 1, %s12
  %s15 = scalar_select 0, %s14, %s12
  $region1: #{tpu_custom_call.1} parent=0
    #allocation2 [shape = 'u8[8192]{0}', space=vmem, size = 0x2000, scoped, tag = 'input window, operand 0, single buffered']
    #allocation3 [shape = 's32[1]{0}', space=sflag, size = 0x4, scoped, tag = 'scoped memory for tpu_custom_call.1']
    #allocation4 [shape = 's32[1]{0}', space=sflag, size = 0x4, scoped, tag = 'scoped memory for tpu_custom_call.1']
    #allocation5 [shape = 'u8[4096]{0}', space=vmem, size = 0x1000, scoped, tag = 'input window, operand 1, single buffered']
    #allocation6 [shape = 's32[1]{0}', space=sflag, size = 0x4, scoped, tag = 'scoped memory for tpu_custom_call.1']
    #allocation7 [shape = 'u8[262144]{0}', space=vmem, size = 0x40000, scoped, tag = 'input window, operand 2, single buffered']
    #allocation8 [shape = 'u8[2048]{0}', space=vmem, size = 0x800, scoped, tag = 'input window, operand 3, single buffered']
    #allocation9 [shape = 's32[1]{0}', space=sflag, size = 0x4, scoped, tag = 'scoped memory for tpu_custom_call.1']
    #allocation10 [shape = 'u8[131072]{0}', space=vmem, size = 0x20000, scoped, tag = 'input window, operand 4, single buffered']
    #allocation11 [shape = 'u8[131072]{0}', space=vmem, size = 0x20000, scoped, tag = 'input window, operand 6, single buffered']
    #allocation12 [shape = 's32[1]{0}', space=sflag, size = 0x4, scoped, tag = 'scoped memory for tpu_custom_call.1']
    #allocation13 [shape = 'u8[32768]{0}', space=vmem, size = 0x8000, scoped, tag = 'input window, operand 8, single buffered']
    #allocation14 [shape = 'u8[32768]{0}', space=vmem, size = 0x8000, scoped, tag = 'input window, operand 9, single buffered']
    #allocation15 [shape = 's32[1]{0}', space=sflag, size = 0x4, scoped, tag = 'scoped memory for tpu_custom_call.1']
    #allocation16 [shape = 'u8[4096]{0}', space=vmem, size = 0x1000, scoped, tag = 'output window, operand 0, single buffered']
    %16 = vsyncpa [#allocation3], 0
    %17 = vsyncpa [#allocation6], 0
    %18 = vsyncpa [#allocation9], 0
    %19 = vsyncpa [#allocation12], 0
    %20 = vsyncpa [#allocation15], 0
    %21 = vsyncpa [#allocation4], 0
    // Predicated region
    $region2: #{tpu_custom_call.1} parent=1 // pred_check
      _
    $region3: #{tpu_custom_call.1} parent=1 // pred_check_branch
      %23 = sbr.rel (0) target = $region5
    $region4: #{tpu_custom_call.1} parent=1 // pred_region
      %25 = vsyncadd [#allocation3], 0
      %s27 = sshll.u32 %s0, 4
      %s28 = int_to_ptr.hbm [resolvable:$true] %s27
      %s29 = sshll.u32 [#allocation2], 4
      %s30 = int_to_ptr.vmem [resolvable:$true] %s29
      %32 = dma.hbm_to_vmem [thread:$0]  %s28, 256, %s30, [#allocation3]
    $region5: #{tpu_custom_call.1} parent=1 // pred_fallthru
      _
    // Predicated region
    $region6: #{tpu_custom_call.1} parent=1 // pred_check
      _
    $region7: #{tpu_custom_call.1} parent=1 // pred_check_branch
      %34 = sbr.rel (0) target = $region9
    $region8: #{tpu_custom_call.1} parent=1 // pred_region
      %36 = vsyncadd [#allocation6], 0
      %s38 = sshll.u32 %s1, 4
      %s39 = int_to_ptr.hbm [resolvable:$true] %s38
      %s40 = sshll.u32 [#allocation5], 4
      %s41 = int_to_ptr.vmem [resolvable:$true] %s40
      %43 = dma.hbm_to_vmem [thread:$0]  %s39, 128, %s41, [#allocation6]
    $region9: #{tpu_custom_call.1} parent=1 // pred_fallthru
      _
    // Predicated region
    $region10: #{tpu_custom_call.1} parent=1 // pred_check
      _
    $region11: #{tpu_custom_call.1} parent=1 // pred_check_branch
      %45 = sbr.rel (0) target = $region13
    $region12: #{tpu_custom_call.1} parent=1 // pred_region
      %47 = vsyncadd [#allocation6], 0
      %s48 = sshll.u32 %s2, 4
      %s49 = int_to_ptr.hbm [resolvable:$true] %s48
      %s50 = sshll.u32 [#allocation7], 4
      %s51 = int_to_ptr.vmem [resolvable:$true] %s50
      %56 = dma.hbm_to_vmem [thread:$0]  %s49, 8192, %s51, [#allocation6], 256, 256, 16
    $region13: #{tpu_custom_call.1} parent=1 // pred_fallthru
      _
    // Predicated region
    $region14: #{tpu_custom_call.1} parent=1 // pred_check
      _
    $region15: #{tpu_custom_call.1} parent=1 // pred_check_branch
      %58 = sbr.rel (0) target = $region17
    $region16: #{tpu_custom_call.1} parent=1 // pred_region
      %60 = vsyncadd [#allocation9], 0
      %s62 = sshll.u32 %s3, 4
      %s63 = int_to_ptr.hbm [resolvable:$true] %s62
      %s64 = sshll.u32 [#allocation8], 4
      %s65 = int_to_ptr.vmem [resolvable:$true] %s64
      %67 = dma.hbm_to_vmem [thread:$0]  %s63, 64, %s65, [#allocation9]
    $region17: #{tpu_custom_call.1} parent=1 // pred_fallthru
      _
    // Predicated region
    $region18: #{tpu_custom_call.1} parent=1 // pred_check
      _
    $region19: #{tpu_custom_call.1} parent=1 // pred_check_branch
      %69 = sbr.rel (0) target = $region21
    $region20: #{tpu_custom_call.1} parent=1 // pred_region
      %71 = vsyncadd [#allocation9], 0
      %s72 = sshll.u32 %s4, 4
      %s73 = int_to_ptr.hbm [resolvable:$true] %s72
      %s74 = sshll.u32 [#allocation10], 4
      %s75 = int_to_ptr.vmem [resolvable:$true] %s74
      %80 = dma.hbm_to_vmem [thread:$0]  %s73, 4096, %s75, [#allocation9], 256, 256, 16
    $region21: #{tpu_custom_call.1} parent=1 // pred_fallthru
      _
    // Predicated region
    $region22: #{tpu_custom_call.1} parent=1 // pred_check
      _
    $region23: #{tpu_custom_call.1} parent=1 // pred_check_branch
      %82 = sbr.rel (0) target = $region25
    $region24: #{tpu_custom_call.1} parent=1 // pred_region
      _
    $region25: #{tpu_custom_call.1} parent=1 // pred_fallthru
      _
    // Predicated region
    $region26: #{tpu_custom_call.1} parent=1 // pred_check
      _
    $region27: #{tpu_custom_call.1} parent=1 // pred_check_branch
      %84 = sbr.rel (0) target = $region29
    $region28: #{tpu_custom_call.1} parent=1 // pred_region
      %86 = vsyncadd [#allocation12], 0
      %s87 = sshll.u32 %s6, 4
      %s88 = int_to_ptr.hbm [resolvable:$true] %s87
      %s89 = sshll.u32 [#allocation11], 4
      %s90 = int_to_ptr.vmem [resolvable:$true] %s89
      %95 = dma.hbm_to_vmem [thread:$0]  %s88, 4096, %s90, [#allocation12], 64, 64, 4
    $region29: #{tpu_custom_call.1} parent=1 // pred_fallthru
      _
    // Predicated region
    $region30: #{tpu_custom_call.1} parent=1 // pred_check
      _
    $region31: #{tpu_custom_call.1} parent=1 // pred_check_branch
      %97 = sbr.rel (0) target = $region33
    $region32: #{tpu_custom_call.1} parent=1 // pred_region
      _
    $region33: #{tpu_custom_call.1} parent=1 // pred_fallthru
      _
    // Predicated region
    $region34: #{tpu_custom_call.1} parent=1 // pred_check
      _
    $region35: #{tpu_custom_call.1} parent=1 // pred_check_branch
      %99 = sbr.rel (0) target = $region37
    $region36: #{tpu_custom_call.1} parent=1 // pred_region
      %101 = vsyncadd [#allocation12], 0
      %s102 = sshll.u32 %s8, 4
      %s103 = int_to_ptr.hbm [resolvable:$true] %s102
      %s104 = sshll.u32 [#allocation13], 4
      %s105 = int_to_ptr.vmem [resolvable:$true] %s104
      %110 = dma.hbm_to_vmem [thread:$0]  %s103, 1024, %s105, [#allocation12], 64, 64, 4
    $region37: #{tpu_custom_call.1} parent=1 // pred_fallthru
      _
    // Predicated region
    $region38: #{tpu_custom_call.1} parent=1 // pred_check
      _
    $region39: #{tpu_custom_call.1} parent=1 // pred_check_branch
      %112 = sbr.rel (0) target = $region41
    $region40: #{tpu_custom_call.1} parent=1 // pred_region
      %114 = vsyncadd [#allocation15], 0
      %s115 = sshll.u32 %s9, 4
      %s116 = int_to_ptr.hbm [resolvable:$true] %s115
      %s117 = sshll.u32 [#allocation14], 4
      %s118 = int_to_ptr.vmem [resolvable:$true] %s117
      %123 = dma.hbm_to_vmem [thread:$0]  %s116, 1024, %s118, [#allocation15], 64, 64, 4
    $region41: #{tpu_custom_call.1} parent=1 // pred_fallthru
      _
    // Predicated region
    $region42: #{tpu_custom_call.1} parent=1 // pred_check
      _
    $region43: #{tpu_custom_call.1} parent=1 // pred_check_branch
      %125 = sbr.rel (0) target = $region45
    $region44: #{tpu_custom_call.1} parent=1 // pred_region
      _
    $region45: #{tpu_custom_call.1} parent=1 // pred_fallthru
      _
    // Predicated region
    $region46: #{tpu_custom_call.1} parent=1 // pred_check
      _
    $region47: #{tpu_custom_call.1} parent=1 // pred_check_branch
      %127 = sbr.rel (0) target = $region49
    $region48: #{tpu_custom_call.1} parent=1 // pred_region
      %129 = dma.done [#allocation3], 256
    $region49: #{tpu_custom_call.1} parent=1 // pred_fallthru
      _
    // Predicated region
    $region50: #{tpu_custom_call.1} parent=1 // pred_check
      _
    $region51: #{tpu_custom_call.1} parent=1 // pred_check_branch
      %131 = sbr.rel (0) target = $region53
    $region52: #{tpu_custom_call.1} parent=1 // pred_region
      %133 = dma.done [#allocation6], 128
    $region53: #{tpu_custom_call.1} parent=1 // pred_fallthru
      _
    // Predicated region
    $region54: #{tpu_custom_call.1} parent=1 // pred_check
      _
    $region55: #{tpu_custom_call.1} parent=1 // pred_check_branch
      %135 = sbr.rel (0) target = $region57
    $region56: #{tpu_custom_call.1} parent=1 // pred_region
      %137 = dma.done [#allocation6], 8192
    $region57: #{tpu_custom_call.1} parent=1 // pred_fallthru
      _
    // Predicated region
    $region58: #{tpu_custom_call.1} parent=1 // pred_check
      _
    $region59: #{tpu_custom_call.1} parent=1 // pred_check_branch
      %139 = sbr.rel (0) target = $region61
    $region60: #{tpu_custom_call.1} parent=1 // pred_region
      %141 = dma.done [#allocation9], 64
    $region61: #{tpu_custom_call.1} parent=1 // pred_fallthru
      _
    // Predicated region
    $region62: #{tpu_custom_call.1} parent=1 // pred_check
      _
    $region63: #{tpu_custom_call.1} parent=1 // pred_check_branch
      %143 = sbr.rel (0) target = $region65
    $region64: #{tpu_custom_call.1} parent=1 // pred_region
      %145 = dma.done [#allocation9], 4096
    $region65: #{tpu_custom_call.1} parent=1 // pred_fallthru
      _
    // Predicated region
    $region66: #{tpu_custom_call.1} parent=1 // pred_check
      _
    $region67: #{tpu_custom_call.1} parent=1 // pred_check_branch
      %147 = sbr.rel (0) target = $region69
    $region68: #{tpu_custom_call.1} parent=1 // pred_region
      %149 = dma.done [#allocation12], 4096
    $region69: #{tpu_custom_call.1} parent=1 // pred_fallthru
      _
    // Predicated region
    $region70: #{tpu_custom_call.1} parent=1 // pred_check
      _
    $region71: #{tpu_custom_call.1} parent=1 // pred_check_branch
      %151 = sbr.rel (0) target = $region73
    $region72: #{tpu_custom_call.1} parent=1 // pred_region
      %153 = dma.done [#allocation12], 1024
    $region73: #{tpu_custom_call.1} parent=1 // pred_fallthru
      _
    // Predicated region
    $region74: #{tpu_custom_call.1} parent=1 // pred_check
      _
    $region75: #{tpu_custom_call.1} parent=1 // pred_check_branch
      %155 = sbr.rel (0) target = $region77
    $region76: #{tpu_custom_call.1} parent=1 // pred_region
      %157 = dma.done [#allocation15], 1024
    $region77: #{tpu_custom_call.1} parent=1 // pred_fallthru
      _
    %v158 = vld [vmem:[#allocation2] sm:$0xff]
    %v159 = vld [vmem:[#allocation2 + $0x8] sm:$0xff]
    %v160 = vpack.c.bf16 %v158, %v158
    %v161 = vpack.c.bf16 %v159, %v159
    %v162 = vld [vmem:[#allocation5] sm:$0xff]
    %v163 = vpack.c.bf16 %v162, %v162
    %v164 = vld [vmem:[#allocation7] sm:$0xff]
    %v165 = vld [vmem:[#allocation7 + $0x8] sm:$0xff]
    %v166 = vld [vmem:[#allocation7 + $0x10] sm:$0xff]
    %v167 = vld [vmem:[#allocation7 + $0x18] sm:$0xff]
    %v168 = vld [vmem:[#allocation7 + $0x20] sm:$0xff]
    %v169 = vld [vmem:[#allocation7 + $0x28] sm:$0xff]
    %v170 = vld [vmem:[#allocation7 + $0x30] sm:$0xff]
    %v171 = vld [vmem:[#allocation7 + $0x38] sm:$0xff]
    %v172 = vld [vmem:[#allocation7 + $0x40] sm:$0xff]
    %v173 = vld [vmem:[#allocation7 + $0x48] sm:$0xff]
    %v174 = vld [vmem:[#allocation7 + $0x50] sm:$0xff]
    %v175 = vld [vmem:[#allocation7 + $0x58] sm:$0xff]
    %v176 = vld [vmem:[#allocation7 + $0x60] sm:$0xff]
    %v177 = vld [vmem:[#allocation7 + $0x68] sm:$0xff]
    %v178 = vld [vmem:[#allocation7 + $0x70] sm:$0xff]
    %v179 = vld [vmem:[#allocation7 + $0x78] sm:$0xff]
    %v180 = vld [vmem:[#allocation7 + $0x80] sm:$0xff]
    %v181 = vld [vmem:[#allocation7 + $0x88] sm:$0xff]
    %v182 = vld [vmem:[#allocation7 + $0x90] sm:$0xff]
    %v183 = vld [vmem:[#allocation7 + $0x98] sm:$0xff]
    %v184 = vld [vmem:[#allocation7 + $0xa0] sm:$0xff]
    %v185 = vld [vmem:[#allocation7 + $0xa8] sm:$0xff]
    %v186 = vld [vmem:[#allocation7 + $0xb0] sm:$0xff]
    %v187 = vld [vmem:[#allocation7 + $0xb8] sm:$0xff]
    %v188 = vld [vmem:[#allocation7 + $0xc0] sm:$0xff]
    %v189 = vld [vmem:[#allocation7 + $0xc8] sm:$0xff]
    %v190 = vld [vmem:[#allocation7 + $0xd0] sm:$0xff]
    %v191 = vld [vmem:[#allocation7 + $0xd8] sm:$0xff]
    %v192 = vld [vmem:[#allocation7 + $0xe0] sm:$0xff]
    %v193 = vld [vmem:[#allocation7 + $0xe8] sm:$0xff]
    %v194 = vld [vmem:[#allocation7 + $0xf0] sm:$0xff]
    %v195 = vld [vmem:[#allocation7 + $0xf8] sm:$0xff]
    %v196 = vld [vmem:[#allocation7 + $0x100] sm:$0xff]
    %v197 = vld [vmem:[#allocation7 + $0x108] sm:$0xff]
    %v198 = vld [vmem:[#allocation7 + $0x110] sm:$0xff]
    %v199 = vld [vmem:[#allocation7 + $0x118] sm:$0xff]
    %v200 = vld [vmem:[#allocation7 + $0x120] sm:$0xff]
    %v201 = vld [vmem:[#allocation7 + $0x128] sm:$0xff]
    %v202 = vld [vmem:[#allocation7 + $0x130] sm:$0xff]
    %v203 = vld [vmem:[#allocation7 + $0x138] sm:$0xff]
    %v204 = vld [vmem:[#allocation7 + $0x140] sm:$0xff]
    %v205 = vld [vmem:[#allocation7 + $0x148] sm:$0xff]
    %v206 = vld [vmem:[#allocation7 + $0x150] sm:$0xff]
    %v207 = vld [vmem:[#allocation7 + $0x158] sm:$0xff]
    %v208 = vld [vmem:[#allocation7 + $0x160] sm:$0xff]
    %v209 = vld [vmem:[#allocation7 + $0x168] sm:$0xff]
    %v210 = vld [vmem:[#allocation7 + $0x170] sm:$0xff]
    %v211 = vld [vmem:[#allocation7 + $0x178] sm:$0xff]
    %v212 = vld [vmem:[#allocation7 + $0x180] sm:$0xff]
    %v213 = vld [vmem:[#allocation7 + $0x188] sm:$0xff]
    %v214 = vld [vmem:[#allocation7 + $0x190] sm:$0xff]
    %v215 = vld [vmem:[#allocation7 + $0x198] sm:$0xff]
    %v216 = vld [vmem:[#allocation7 + $0x1a0] sm:$0xff]
    %v217 = vld [vmem:[#allocation7 + $0x1a8] sm:$0xff]
    %v218 = vld [vmem:[#allocation7 + $0x1b0] sm:$0xff]
    %v219 = vld [vmem:[#allocation7 + $0x1b8] sm:$0xff]
    %v220 = vld [vmem:[#allocation7 + $0x1c0] sm:$0xff]
    %v221 = vld [vmem:[#allocation7 + $0x1c8] sm:$0xff]
    %v222 = vld [vmem:[#allocation7 + $0x1d0] sm:$0xff]
    %v223 = vld [vmem:[#allocation7 + $0x1d8] sm:$0xff]
    %v224 = vld [vmem:[#allocation7 + $0x1e0] sm:$0xff]
    %v225 = vld [vmem:[#allocation7 + $0x1e8] sm:$0xff]
    %v226 = vld [vmem:[#allocation7 + $0x1f0] sm:$0xff]
    %v227 = vld [vmem:[#allocation7 + $0x1f8] sm:$0xff]
    %v228 = vld [vmem:[#allocation8] sm:$0xf]
    %v230 = vperm.slane %v228, 0
    %v231 = vperm.slane %v228, 1
    %v232 = vperm.slane %v228, 2
    %v233 = vperm.slane %v228, 3
    %v302 = vunpack.c.l.b16 %v164
    %v303 = vunpack.c.h.b16 %v164
    %v304 = vunpack.c.l.b16 %v165
    %v305 = vunpack.c.h.b16 %v165
    %v306 = vunpack.c.l.b16 %v166
    %v307 = vunpack.c.h.b16 %v166
    %v308 = vunpack.c.l.b16 %v167
    %v309 = vunpack.c.h.b16 %v167
    %v310 = vunpack.c.l.b16 %v168
    %v311 = vunpack.c.h.b16 %v168
    %v312 = vunpack.c.l.b16 %v169
    %v313 = vunpack.c.h.b16 %v169
    %v314 = vunpack.c.l.b16 %v170
    %v315 = vunpack.c.h.b16 %v170
    %v316 = vunpack.c.l.b16 %v171
    %v317 = vunpack.c.h.b16 %v171
    %v318 = vunpack.c.l.b16 %v172
    %v319 = vunpack.c.h.b16 %v172
    %v320 = vunpack.c.l.b16 %v173
    %v321 = vunpack.c.h.b16 %v173
    %v322 = vunpack.c.l.b16 %v174
    %v323 = vunpack.c.h.b16 %v174
    %v324 = vunpack.c.l.b16 %v175
    %v325 = vunpack.c.h.b16 %v175
    %v326 = vunpack.c.l.b16 %v176
    %v327 = vunpack.c.h.b16 %v176
    %v328 = vunpack.c.l.b16 %v177
    %v329 = vunpack.c.h.b16 %v177
    %v330 = vunpack.c.l.b16 %v178
    %v331 = vunpack.c.h.b16 %v178
    %v332 = vunpack.c.l.b16 %v179
    %v333 = vunpack.c.h.b16 %v179
    %v334 = vunpack.c.l.b16 %v180
    %v335 = vunpack.c.h.b16 %v180
    %v336 = vunpack.c.l.b16 %v181
    %v337 = vunpack.c.h.b16 %v181
    %v338 = vunpack.c.l.b16 %v182
    %v339 = vunpack.c.h.b16 %v182
    %v340 = vunpack.c.l.b16 %v183
    %v341 = vunpack.c.h.b16 %v183
    %v342 = vunpack.c.l.b16 %v184
    %v343 = vunpack.c.h.b16 %v184
    %v344 = vunpack.c.l.b16 %v185
    %v345 = vunpack.c.h.b16 %v185
    %v346 = vunpack.c.l.b16 %v186
    %v347 = vunpack.c.h.b16 %v186
    %v348 = vunpack.c.l.b16 %v187
    %v349 = vunpack.c.h.b16 %v187
    %v350 = vunpack.c.l.b16 %v188
    %v351 = vunpack.c.h.b16 %v188
    %v352 = vunpack.c.l.b16 %v189
    %v353 = vunpack.c.h.b16 %v189
    %v354 = vunpack.c.l.b16 %v190
    %v355 = vunpack.c.h.b16 %v190
    %v356 = vunpack.c.l.b16 %v191
    %v357 = vunpack.c.h.b16 %v191
    %v358 = vunpack.c.l.b16 %v192
    %v359 = vunpack.c.h.b16 %v192
    %v360 = vunpack.c.l.b16 %v193
    %v361 = vunpack.c.h.b16 %v193
    %v362 = vunpack.c.l.b16 %v194
    %v363 = vunpack.c.h.b16 %v194
    %v364 = vunpack.c.l.b16 %v195
    %v365 = vunpack.c.h.b16 %v195
    %v366 = vunpack.c.l.b16 %v196
    %v367 = vunpack.c.h.b16 %v196
    %v368 = vunpack.c.l.b16 %v197
    %v369 = vunpack.c.h.b16 %v197
    %v370 = vunpack.c.l.b16 %v198
    %v371 = vunpack.c.h.b16 %v198
    %v372 = vunpack.c.l.b16 %v199
    %v373 = vunpack.c.h.b16 %v199
    %v374 = vunpack.c.l.b16 %v200
    %v375 = vunpack.c.h.b16 %v200
    %v376 = vunpack.c.l.b16 %v201
    %v377 = vunpack.c.h.b16 %v201
    %v378 = vunpack.c.l.b16 %v202
    %v379 = vunpack.c.h.b16 %v202
    %v380 = vunpack.c.l.b16 %v203
    %v381 = vunpack.c.h.b16 %v203
    %v382 = vunpack.c.l.b16 %v204
    %v383 = vunpack.c.h.b16 %v204
    %v384 = vunpack.c.l.b16 %v205
    %v385 = vunpack.c.h.b16 %v205
    %v386 = vunpack.c.l.b16 %v206
    %v387 = vunpack.c.h.b16 %v206
    %v388 = vunpack.c.l.b16 %v207
    %v389 = vunpack.c.h.b16 %v207
    %v390 = vunpack.c.l.b16 %v208
    %v391 = vunpack.c.h.b16 %v208
    %v392 = vunpack.c.l.b16 %v209
    %v393 = vunpack.c.h.b16 %v209
    %v394 = vunpack.c.l.b16 %v210
    %v395 = vunpack.c.h.b16 %v210
    %v396 = vunpack.c.l.b16 %v211
    %v397 = vunpack.c.h.b16 %v211
    %v398 = vunpack.c.l.b16 %v212
    %v399 = vunpack.c.h.b16 %v212
    %v400 = vunpack.c.l.b16 %v213
    %v401 = vunpack.c.h.b16 %v213
    %v402 = vunpack.c.l.b16 %v214
    %v403 = vunpack.c.h.b16 %v214
    %v404 = vunpack.c.l.b16 %v215
    %v405 = vunpack.c.h.b16 %v215
    %v406 = vunpack.c.l.b16 %v216
    %v407 = vunpack.c.h.b16 %v216
    %v408 = vunpack.c.l.b16 %v217
    %v409 = vunpack.c.h.b16 %v217
    %v410 = vunpack.c.l.b16 %v218
    %v411 = vunpack.c.h.b16 %v218
    %v412 = vunpack.c.l.b16 %v219
    %v413 = vunpack.c.h.b16 %v219
    %v414 = vunpack.c.l.b16 %v220
    %v415 = vunpack.c.h.b16 %v220
    %v416 = vunpack.c.l.b16 %v221
    %v417 = vunpack.c.h.b16 %v221
    %v418 = vunpack.c.l.b16 %v222
    %v419 = vunpack.c.h.b16 %v222
    %v420 = vunpack.c.l.b16 %v223
    %v421 = vunpack.c.h.b16 %v223
    %v422 = vunpack.c.l.b16 %v224
    %v423 = vunpack.c.h.b16 %v224
    %v424 = vunpack.c.l.b16 %v225
    %v425 = vunpack.c.h.b16 %v225
    %v426 = vunpack.c.l.b16 %v226
    %v427 = vunpack.c.h.b16 %v226
    %v428 = vunpack.c.l.b16 %v227
    %v429 = vunpack.c.h.b16 %v227
    %v430 = vpack.c.b16 %v306, %v302
    %v431 = vpack.c.b16 %v307, %v303
    %v432 = vpack.c.b16 %v308, %v304
    %v433 = vpack.c.b16 %v309, %v305
    %v434 = vpack.c.b16 %v314, %v310
    %v435 = vpack.c.b16 %v315, %v311
    %v436 = vpack.c.b16 %v316, %v312
    %v437 = vpack.c.b16 %v317, %v313
    %v438 = vpack.c.b16 %v322, %v318
    %v439 = vpack.c.b16 %v323, %v319
    %v440 = vpack.c.b16 %v324, %v320
    %v441 = vpack.c.b16 %v325, %v321
    %v442 = vpack.c.b16 %v330, %v326
    %v443 = vpack.c.b16 %v331, %v327
    %v444 = vpack.c.b16 %v332, %v328
    %v445 = vpack.c.b16 %v333, %v329
    %v446 = vpack.c.b16 %v338, %v334
    %v447 = vpack.c.b16 %v339, %v335
    %v448 = vpack.c.b16 %v340, %v336
    %v449 = vpack.c.b16 %v341, %v337
    %v450 = vpack.c.b16 %v346, %v342
    %v451 = vpack.c.b16 %v347, %v343
    %v452 = vpack.c.b16 %v348, %v344
    %v453 = vpack.c.b16 %v349, %v345
    %v454 = vpack.c.b16 %v354, %v350
    %v455 = vpack.c.b16 %v355, %v351
    %v456 = vpack.c.b16 %v356, %v352
    %v457 = vpack.c.b16 %v357, %v353
    %v458 = vpack.c.b16 %v362, %v358
    %v459 = vpack.c.b16 %v363, %v359
    %v460 = vpack.c.b16 %v364, %v360
    %v461 = vpack.c.b16 %v365, %v361
    %v462 = vpack.c.b16 %v370, %v366
    %v463 = vpack.c.b16 %v371, %v367
    %v464 = vpack.c.b16 %v372, %v368
    %v465 = vpack.c.b16 %v373, %v369
    %v466 = vpack.c.b16 %v378, %v374
    %v467 = vpack.c.b16 %v379, %v375
    %v468 = vpack.c.b16 %v380, %v376
    %v469 = vpack.c.b16 %v381, %v377
    %v470 = vpack.c.b16 %v386, %v382
    %v471 = vpack.c.b16 %v387, %v383
    %v472 = vpack.c.b16 %v388, %v384
    %v473 = vpack.c.b16 %v389, %v385
    %v474 = vpack.c.b16 %v394, %v390
    %v475 = vpack.c.b16 %v395, %v391
    %v476 = vpack.c.b16 %v396, %v392
    %v477 = vpack.c.b16 %v397, %v393
    %v478 = vpack.c.b16 %v402, %v398
    %v479 = vpack.c.b16 %v403, %v399
    %v480 = vpack.c.b16 %v404, %v400
    %v481 = vpack.c.b16 %v405, %v401
    %v482 = vpack.c.b16 %v410, %v406
    %v483 = vpack.c.b16 %v411, %v407
    %v484 = vpack.c.b16 %v412, %v408
    %v485 = vpack.c.b16 %v413, %v409
    %v486 = vpack.c.b16 %v418, %v414
    %v487 = vpack.c.b16 %v419, %v415
    %v488 = vpack.c.b16 %v420, %v416
    %v489 = vpack.c.b16 %v421, %v417
    %v490 = vpack.c.b16 %v426, %v422
    %v491 = vpack.c.b16 %v427, %v423
    %v492 = vpack.c.b16 %v428, %v424
    %v493 = vpack.c.b16 %v429, %v425
    %558 = vmatpush.bf16.msra.mxu0 %v458
    %559 = vmatpush.bf16.msra.mxu0 %v454
    %560 = vmatpush.bf16.msra.mxu0 %v450
    %561 = vmatpush.bf16.msra.mxu0 %v446
    %562 = vmatpush.bf16.msra.mxu0 %v442
    %563 = vmatpush.bf16.msra.mxu0 %v438
    %564 = vmatpush.bf16.msra.mxu0 %v434
    %565 = vmatpush.bf16.msra.mxu0 %v430
    %566 = vmatmul.bf16.gmra.mxu0 %v160
    %v567 = vpop.f32.mrf.mxu0
    %v568 = vadd.f32 %v230, %v567
    %v569 = vpop.f32.mrf.mxu0
    %570 = vdwg.mxu0
    %571 = vmatpush.bf16.msra.mxu0 %v490
    %572 = vmatpush.bf16.msra.mxu0 %v486
    %573 = vmatpush.bf16.msra.mxu0 %v482
    %574 = vmatpush.bf16.msra.mxu0 %v478
    %575 = vmatpush.bf16.msra.mxu0 %v474
    %576 = vmatpush.bf16.msra.mxu0 %v470
    %577 = vmatpush.bf16.msra.mxu0 %v466
    %578 = vmatpush.bf16.msra.mxu0 %v462
    %579 = vmatmul.bf16.gmra.mxu0 %v161
    %v580 = vpop.f32.mrf.mxu0
    %v581 = vadd.f32 %v568, %v580
    %v582 = vpop.f32.mrf.mxu0
    %583 = vdwg.mxu0
    %584 = vmatpush.bf16.msra.mxu0 %v459
    %585 = vmatpush.bf16.msra.mxu0 %v455
    %586 = vmatpush.bf16.msra.mxu0 %v451
    %587 = vmatpush.bf16.msra.mxu0 %v447
    %588 = vmatpush.bf16.msra.mxu0 %v443
    %589 = vmatpush.bf16.msra.mxu0 %v439
    %590 = vmatpush.bf16.msra.mxu0 %v435
    %591 = vmatpush.bf16.msra.mxu0 %v431
    %592 = vmatmul.bf16.gmra.mxu0 %v160
    %v593 = vpop.f32.mrf.mxu0
    %v594 = vadd.f32 %v231, %v593
    %v595 = vpop.f32.mrf.mxu0
    %596 = vdwg.mxu0
    %597 = vmatpush.bf16.msra.mxu0 %v491
    %598 = vmatpush.bf16.msra.mxu0 %v487
    %599 = vmatpush.bf16.msra.mxu0 %v483
    %600 = vmatpush.bf16.msra.mxu0 %v479
    %601 = vmatpush.bf16.msra.mxu0 %v475
    %602 = vmatpush.bf16.msra.mxu0 %v471
    %603 = vmatpush.bf16.msra.mxu0 %v467
    %604 = vmatpush.bf16.msra.mxu0 %v463
    %605 = vmatmul.bf16.gmra.mxu0 %v161
    %v606 = vpop.f32.mrf.mxu0
    %v607 = vadd.f32 %v594, %v606
    %v608 = vpop.f32.mrf.mxu0
    %609 = vdwg.mxu0
    %610 = vmatpush.bf16.msra.mxu0 %v460
    %611 = vmatpush.bf16.msra.mxu0 %v456
    %612 = vmatpush.bf16.msra.mxu0 %v452
    %613 = vmatpush.bf16.msra.mxu0 %v448
    %614 = vmatpush.bf16.msra.mxu0 %v444
    %615 = vmatpush.bf16.msra.mxu0 %v440
    %616 = vmatpush.bf16.msra.mxu0 %v436
    %617 = vmatpush.bf16.msra.mxu0 %v432
    %618 = vmatmul.bf16.gmra.mxu0 %v160
    %v619 = vpop.f32.mrf.mxu0
    %v620 = vadd.f32 %v232, %v619
    %v621 = vpop.f32.mrf.mxu0
    %622 = vdwg.mxu0
    %623 = vmatpush.bf16.msra.mxu0 %v492
    %624 = vmatpush.bf16.msra.mxu0 %v488
    %625 = vmatpush.bf16.msra.mxu0 %v484
    %626 = vmatpush.bf16.msra.mxu0 %v480
    %627 = vmatpush.bf16.msra.mxu0 %v476
    %628 = vmatpush.bf16.msra.mxu0 %v472
    %629 = vmatpush.bf16.msra.mxu0 %v468
    %630 = vmatpush.bf16.msra.mxu0 %v464
    %631 = vmatmul.bf16.gmra.mxu0 %v161
    %v632 = vpop.f32.mrf.mxu0
    %v633 = vadd.f32 %v620, %v632
    %v634 = vpop.f32.mrf.mxu0
    %635 = vdwg.mxu0
    %636 = vmatpush.bf16.msra.mxu0 %v461
    %637 = vmatpush.bf16.msra.mxu0 %v457
    %638 = vmatpush.bf16.msra.mxu0 %v453
    %639 = vmatpush.bf16.msra.mxu0 %v449
    %640 = vmatpush.bf16.msra.mxu0 %v445
    %641 = vmatpush.bf16.msra.mxu0 %v441
    %642 = vmatpush.bf16.msra.mxu0 %v437
    %643 = vmatpush.bf16.msra.mxu0 %v433
    %644 = vmatmul.bf16.gmra.mxu0 %v160
    %v645 = vpop.f32.mrf.mxu0
    %v646 = vadd.f32 %v233, %v645
    %v647 = vpop.f32.mrf.mxu0
    %648 = vdwg.mxu0
    %649 = vmatpush.bf16.msra.mxu0 %v493
    %650 = vmatpush.bf16.msra.mxu0 %v489
    %651 = vmatpush.bf16.msra.mxu0 %v485
    %652 = vmatpush.bf16.msra.mxu0 %v481
    %653 = vmatpush.bf16.msra.mxu0 %v477
    %654 = vmatpush.bf16.msra.mxu0 %v473
    %655 = vmatpush.bf16.msra.mxu0 %v469
    %656 = vmatpush.bf16.msra.mxu0 %v465
    %657 = vmatmul.bf16.gmra.mxu0 %v161
    %v658 = vpop.f32.mrf.mxu0
    %v659 = vadd.f32 %v646, %v658
    %v660 = vpop.f32.mrf.mxu0
    %661 = vdwg.mxu0
    %v662 = vmax.f32 %v581, 0.0
    %v663 = vmax.f32 %v607, 0.0
    %v664 = vmax.f32 %v633, 0.0
    %v665 = vmax.f32 %v659, 0.0
    %v666 = vpack.c.bf16 %v662, %v662
    %v667 = vpack.c.bf16 %v663, %v663
    %v668 = vpack.c.bf16 %v664, %v664
    %v669 = vpack.c.bf16 %v665, %v665
    %v670 = vld [vmem:[#allocation10] sm:$0xff]
    %v671 = vld [vmem:[#allocation10 + $0x8] sm:$0xff]
    %v672 = vld [vmem:[#allocation10 + $0x10] sm:$0xff]
    %v673 = vld [vmem:[#allocation10 + $0x18] sm:$0xff]
    %v674 = vld [vmem:[#allocation10 + $0x20] sm:$0xff]
    %v675 = vld [vmem:[#allocation10 + $0x28] sm:$0xff]
    %v676 = vld [vmem:[#allocation10 + $0x30] sm:$0xff]
    %v677 = vld [vmem:[#allocation10 + $0x38] sm:$0xff]
    %v678 = vld [vmem:[#allocation10 + $0x40] sm:$0xff]
    %v679 = vld [vmem:[#allocation10 + $0x48] sm:$0xff]
    %v680 = vld [vmem:[#allocation10 + $0x50] sm:$0xff]
    %v681 = vld [vmem:[#allocation10 + $0x58] sm:$0xff]
    %v682 = vld [vmem:[#allocation10 + $0x60] sm:$0xff]
    %v683 = vld [vmem:[#allocation10 + $0x68] sm:$0xff]
    %v684 = vld [vmem:[#allocation10 + $0x70] sm:$0xff]
    %v685 = vld [vmem:[#allocation10 + $0x78] sm:$0xff]
    %v686 = vld [vmem:[#allocation10 + $0x80] sm:$0xff]
    %v687 = vld [vmem:[#allocation10 + $0x88] sm:$0xff]
    %v688 = vld [vmem:[#allocation10 + $0x90] sm:$0xff]
    %v689 = vld [vmem:[#allocation10 + $0x98] sm:$0xff]
    %v690 = vld [vmem:[#allocation10 + $0xa0] sm:$0xff]
    %v691 = vld [vmem:[#allocation10 + $0xa8] sm:$0xff]
    %v692 = vld [vmem:[#allocation10 + $0xb0] sm:$0xff]
    %v693 = vld [vmem:[#allocation10 + $0xb8] sm:$0xff]
    %v694 = vld [vmem:[#allocation10 + $0xc0] sm:$0xff]
    %v695 = vld [vmem:[#allocation10 + $0xc8] sm:$0xff]
    %v696 = vld [vmem:[#allocation10 + $0xd0] sm:$0xff]
    %v697 = vld [vmem:[#allocation10 + $0xd8] sm:$0xff]
    %v698 = vld [vmem:[#allocation10 + $0xe0] sm:$0xff]
    %v699 = vld [vmem:[#allocation10 + $0xe8] sm:$0xff]
    %v700 = vld [vmem:[#allocation10 + $0xf0] sm:$0xff]
    %v701 = vld [vmem:[#allocation10 + $0xf8] sm:$0xff]
    %v702 = vld [vmem:[%s5] sm:$0xf]
    %v704 = vperm.slane %v702, 0
    %v705 = vperm.slane %v702, 1
    %v706 = vperm.slane %v702, 2
    %v707 = vperm.slane %v702, 3
    %v744 = vunpack.c.l.b16 %v670
    %v745 = vunpack.c.h.b16 %v670
    %v746 = vunpack.c.l.b16 %v671
    %v747 = vunpack.c.h.b16 %v671
    %v748 = vunpack.c.l.b16 %v672
    %v749 = vunpack.c.h.b16 %v672
    %v750 = vunpack.c.l.b16 %v673
    %v751 = vunpack.c.h.b16 %v673
    %v752 = vunpack.c.l.b16 %v674
    %v753 = vunpack.c.h.b16 %v674
    %v754 = vunpack.c.l.b16 %v675
    %v755 = vunpack.c.h.b16 %v675
    %v756 = vunpack.c.l.b16 %v676
    %v757 = vunpack.c.h.b16 %v676
    %v758 = vunpack.c.l.b16 %v677
    %v759 = vunpack.c.h.b16 %v677
    %v760 = vunpack.c.l.b16 %v678
    %v761 = vunpack.c.h.b16 %v678
    %v762 = vunpack.c.l.b16 %v679
    %v763 = vunpack.c.h.b16 %v679
    %v764 = vunpack.c.l.b16 %v680
    %v765 = vunpack.c.h.b16 %v680
    %v766 = vunpack.c.l.b16 %v681
    %v767 = vunpack.c.h.b16 %v681
    %v768 = vunpack.c.l.b16 %v682
    %v769 = vunpack.c.h.b16 %v682
    %v770 = vunpack.c.l.b16 %v683
    %v771 = vunpack.c.h.b16 %v683
    %v772 = vunpack.c.l.b16 %v684
    %v773 = vunpack.c.h.b16 %v684
    %v774 = vunpack.c.l.b16 %v685
    %v775 = vunpack.c.h.b16 %v685
    %v776 = vunpack.c.l.b16 %v686
    %v777 = vunpack.c.h.b16 %v686
    %v778 = vunpack.c.l.b16 %v687
    %v779 = vunpack.c.h.b16 %v687
    %v780 = vunpack.c.l.b16 %v688
    %v781 = vunpack.c.h.b16 %v688
    %v782 = vunpack.c.l.b16 %v689
    %v783 = vunpack.c.h.b16 %v689
    %v784 = vunpack.c.l.b16 %v690
    %v785 = vunpack.c.h.b16 %v690
    %v786 = vunpack.c.l.b16 %v691
    %v787 = vunpack.c.h.b16 %v691
    %v788 = vunpack.c.l.b16 %v692
    %v789 = vunpack.c.h.b16 %v692
    %v790 = vunpack.c.l.b16 %v693
    %v791 = vunpack.c.h.b16 %v693
    %v792 = vunpack.c.l.b16 %v694
    %v793 = vunpack.c.h.b16 %v694
    %v794 = vunpack.c.l.b16 %v695
    %v795 = vunpack.c.h.b16 %v695
    %v796 = vunpack.c.l.b16 %v696
    %v797 = vunpack.c.h.b16 %v696
    %v798 = vunpack.c.l.b16 %v697
    %v799 = vunpack.c.h.b16 %v697
    %v800 = vunpack.c.l.b16 %v698
    %v801 = vunpack.c.h.b16 %v698
    %v802 = vunpack.c.l.b16 %v699
    %v803 = vunpack.c.h.b16 %v699
    %v804 = vunpack.c.l.b16 %v700
    %v805 = vunpack.c.h.b16 %v700
    %v806 = vunpack.c.l.b16 %v701
    %v807 = vunpack.c.h.b16 %v701
    %v808 = vpack.c.b16 %v748, %v744
    %v809 = vpack.c.b16 %v749, %v745
    %v810 = vpack.c.b16 %v750, %v746
    %v811 = vpack.c.b16 %v751, %v747
    %v812 = vpack.c.b16 %v756, %v752
    %v813 = vpack.c.b16 %v757, %v753
    %v814 = vpack.c.b16 %v758, %v754
    %v815 = vpack.c.b16 %v759, %v755
    %v816 = vpack.c.b16 %v764, %v760
    %v817 = vpack.c.b16 %v765, %v761
    %v818 = vpack.c.b16 %v766, %v762
    %v819 = vpack.c.b16 %v767, %v763
    %v820 = vpack.c.b16 %v772, %v768
    %v821 = vpack.c.b16 %v773, %v769
    %v822 = vpack.c.b16 %v774, %v770
    %v823 = vpack.c.b16 %v775, %v771
    %v824 = vpack.c.b16 %v780, %v776
    %v825 = vpack.c.b16 %v781, %v777
    %v826 = vpack.c.b16 %v782, %v778
    %v827 = vpack.c.b16 %v783, %v779
    %v828 = vpack.c.b16 %v788, %v784
    %v829 = vpack.c.b16 %v789, %v785
    %v830 = vpack.c.b16 %v790, %v786
    %v831 = vpack.c.b16 %v791, %v787
    %v832 = vpack.c.b16 %v796, %v792
    %v833 = vpack.c.b16 %v797, %v793
    %v834 = vpack.c.b16 %v798, %v794
    %v835 = vpack.c.b16 %v799, %v795
    %v836 = vpack.c.b16 %v804, %v800
    %v837 = vpack.c.b16 %v805, %v801
    %v838 = vpack.c.b16 %v806, %v802
    %v839 = vpack.c.b16 %v807, %v803
    %872 = vmatpush.bf16.msra.mxu0 %v836
    %873 = vmatpush.bf16.msra.mxu0 %v832
    %874 = vmatpush.bf16.msra.mxu0 %v828
    %875 = vmatpush.bf16.msra.mxu0 %v824
    %876 = vmatpush.bf16.msra.mxu0 %v820
    %877 = vmatpush.bf16.msra.mxu0 %v816
    %878 = vmatpush.bf16.msra.mxu0 %v812
    %879 = vmatpush.bf16.msra.mxu0 %v808
    %880 = vmatmul.bf16.gmra.mxu0 %v163
    %v881 = vpop.f32.mrf.mxu0
    %v882 = vadd.f32 %v704, %v881
    %v883 = vpop.f32.mrf.mxu0
    %884 = vdwg.mxu0
    %885 = vmatpush.bf16.msra.mxu0 %v837
    %886 = vmatpush.bf16.msra.mxu0 %v833
    %887 = vmatpush.bf16.msra.mxu0 %v829
    %888 = vmatpush.bf16.msra.mxu0 %v825
    %889 = vmatpush.bf16.msra.mxu0 %v821
    %890 = vmatpush.bf16.msra.mxu0 %v817
    %891 = vmatpush.bf16.msra.mxu0 %v813
    %892 = vmatpush.bf16.msra.mxu0 %v809
    %893 = vmatmul.bf16.gmra.mxu0 %v163
    %v894 = vpop.f32.mrf.mxu0
    %v895 = vadd.f32 %v705, %v894
    %v896 = vpop.f32.mrf.mxu0
    %897 = vdwg.mxu0
    %898 = vmatpush.bf16.msra.mxu0 %v838
    %899 = vmatpush.bf16.msra.mxu0 %v834
    %900 = vmatpush.bf16.msra.mxu0 %v830
    %901 = vmatpush.bf16.msra.mxu0 %v826
    %902 = vmatpush.bf16.msra.mxu0 %v822
    %903 = vmatpush.bf16.msra.mxu0 %v818
    %904 = vmatpush.bf16.msra.mxu0 %v814
    %905 = vmatpush.bf16.msra.mxu0 %v810
    %906 = vmatmul.bf16.gmra.mxu0 %v163
    %v907 = vpop.f32.mrf.mxu0
    %v908 = vadd.f32 %v706, %v907
    %v909 = vpop.f32.mrf.mxu0
    %910 = vdwg.mxu0
    %911 = vmatpush.bf16.msra.mxu0 %v839
    %912 = vmatpush.bf16.msra.mxu0 %v835
    %913 = vmatpush.bf16.msra.mxu0 %v831
    %914 = vmatpush.bf16.msra.mxu0 %v827
    %915 = vmatpush.bf16.msra.mxu0 %v823
    %916 = vmatpush.bf16.msra.mxu0 %v819
    %917 = vmatpush.bf16.msra.mxu0 %v815
    %918 = vmatpush.bf16.msra.mxu0 %v811
    %919 = vmatmul.bf16.gmra.mxu0 %v163
    %v920 = vpop.f32.mrf.mxu0
    %v921 = vadd.f32 %v707, %v920
    %v922 = vpop.f32.mrf.mxu0
    %923 = vdwg.mxu0
    %v924 = vmax.f32 %v882, 0.0
    %v925 = vmax.f32 %v895, 0.0
    %v926 = vmax.f32 %v908, 0.0
    %v927 = vmax.f32 %v921, 0.0
    %v928 = vpack.c.bf16 %v924, %v924
    %v929 = vpack.c.bf16 %v925, %v925
    %v930 = vpack.c.bf16 %v926, %v926
    %v931 = vpack.c.bf16 %v927, %v927
    %v932 = vld [vmem:[#allocation11] sm:$0xf]
    %v933 = vld [vmem:[#allocation11 + $0x4] sm:$0xf]
    %v934 = vld [vmem:[#allocation11 + $0x8] sm:$0xf]
    %v935 = vld [vmem:[#allocation11 + $0xc] sm:$0xf]
    %v936 = vld [vmem:[#allocation11 + $0x10] sm:$0xf]
    %v937 = vld [vmem:[#allocation11 + $0x14] sm:$0xf]
    %v938 = vld [vmem:[#allocation11 + $0x18] sm:$0xf]
    %v939 = vld [vmem:[#allocation11 + $0x1c] sm:$0xf]
    %v940 = vld [vmem:[#allocation11 + $0x20] sm:$0xf]
    %v941 = vld [vmem:[#allocation11 + $0x24] sm:$0xf]
    %v942 = vld [vmem:[#allocation11 + $0x28] sm:$0xf]
    %v943 = vld [vmem:[#allocation11 + $0x2c] sm:$0xf]
    %v944 = vld [vmem:[#allocation11 + $0x30] sm:$0xf]
    %v945 = vld [vmem:[#allocation11 + $0x34] sm:$0xf]
    %v946 = vld [vmem:[#allocation11 + $0x38] sm:$0xf]
    %v947 = vld [vmem:[#allocation11 + $0x3c] sm:$0xf]
    %v948 = vld [vmem:[#allocation11 + $0x40] sm:$0xf]
    %v949 = vld [vmem:[#allocation11 + $0x44] sm:$0xf]
    %v950 = vld [vmem:[#allocation11 + $0x48] sm:$0xf]
    %v951 = vld [vmem:[#allocation11 + $0x4c] sm:$0xf]
    %v952 = vld [vmem:[#allocation11 + $0x50] sm:$0xf]
    %v953 = vld [vmem:[#allocation11 + $0x54] sm:$0xf]
    %v954 = vld [vmem:[#allocation11 + $0x58] sm:$0xf]
    %v955 = vld [vmem:[#allocation11 + $0x5c] sm:$0xf]
    %v956 = vld [vmem:[#allocation11 + $0x60] sm:$0xf]
    %v957 = vld [vmem:[#allocation11 + $0x64] sm:$0xf]
    %v958 = vld [vmem:[#allocation11 + $0x68] sm:$0xf]
    %v959 = vld [vmem:[#allocation11 + $0x6c] sm:$0xf]
    %v960 = vld [vmem:[#allocation11 + $0x70] sm:$0xf]
    %v961 = vld [vmem:[#allocation11 + $0x74] sm:$0xf]
    %v962 = vld [vmem:[#allocation11 + $0x78] sm:$0xf]
    %v963 = vld [vmem:[#allocation11 + $0x7c] sm:$0xf]
    %v964 = vld [vmem:[#allocation11 + $0x80] sm:$0xf]
    %v965 = vld [vmem:[#allocation11 + $0x84] sm:$0xf]
    %v966 = vld [vmem:[#allocation11 + $0x88] sm:$0xf]
    %v967 = vld [vmem:[#allocation11 + $0x8c] sm:$0xf]
    %v968 = vld [vmem:[#allocation11 + $0x90] sm:$0xf]
    %v969 = vld [vmem:[#allocation11 + $0x94] sm:$0xf]
    %v970 = vld [vmem:[#allocation11 + $0x98] sm:$0xf]
    %v971 = vld [vmem:[#allocation11 + $0x9c] sm:$0xf]
    %v972 = vld [vmem:[#allocation11 + $0xa0] sm:$0xf]
    %v973 = vld [vmem:[#allocation11 + $0xa4] sm:$0xf]
    %v974 = vld [vmem:[#allocation11 + $0xa8] sm:$0xf]
    %v975 = vld [vmem:[#allocation11 + $0xac] sm:$0xf]
    %v976 = vld [vmem:[#allocation11 + $0xb0] sm:$0xf]
    %v977 = vld [vmem:[#allocation11 + $0xb4] sm:$0xf]
    %v978 = vld [vmem:[#allocation11 + $0xb8] sm:$0xf]
    %v979 = vld [vmem:[#allocation11 + $0xbc] sm:$0xf]
    %v980 = vld [vmem:[#allocation11 + $0xc0] sm:$0xf]
    %v981 = vld [vmem:[#allocation11 + $0xc4] sm:$0xf]
    %v982 = vld [vmem:[#allocation11 + $0xc8] sm:$0xf]
    %v983 = vld [vmem:[#allocation11 + $0xcc] sm:$0xf]
    %v984 = vld [vmem:[#allocation11 + $0xd0] sm:$0xf]
    %v985 = vld [vmem:[#allocation11 + $0xd4] sm:$0xf]
    %v986 = vld [vmem:[#allocation11 + $0xd8] sm:$0xf]
    %v987 = vld [vmem:[#allocation11 + $0xdc] sm:$0xf]
    %v988 = vld [vmem:[#allocation11 + $0xe0] sm:$0xf]
    %v989 = vld [vmem:[#allocation11 + $0xe4] sm:$0xf]
    %v990 = vld [vmem:[#allocation11 + $0xe8] sm:$0xf]
    %v991 = vld [vmem:[#allocation11 + $0xec] sm:$0xf]
    %v992 = vld [vmem:[#allocation11 + $0xf0] sm:$0xf]
    %v993 = vld [vmem:[#allocation11 + $0xf4] sm:$0xf]
    %v994 = vld [vmem:[#allocation11 + $0xf8] sm:$0xf]
    %v995 = vld [vmem:[#allocation11 + $0xfc] sm:$0xf]
    %v996 = vld [vmem:[%s7] sm:$0x1]
    %v998 = vperm.slane %v996, 0
    %v1064 = vunpack.c.l.b16 %v932
    %v1065 = vunpack.c.l.b16 %v933
    %v1066 = vunpack.c.l.b16 %v934
    %v1067 = vunpack.c.l.b16 %v935
    %v1068 = vunpack.c.l.b16 %v936
    %v1069 = vunpack.c.l.b16 %v937
    %v1070 = vunpack.c.l.b16 %v938
    %v1071 = vunpack.c.l.b16 %v939
    %v1072 = vunpack.c.l.b16 %v940
    %v1073 = vunpack.c.l.b16 %v941
    %v1074 = vunpack.c.l.b16 %v942
    %v1075 = vunpack.c.l.b16 %v943
    %v1076 = vunpack.c.l.b16 %v944
    %v1077 = vunpack.c.l.b16 %v945
    %v1078 = vunpack.c.l.b16 %v946
    %v1079 = vunpack.c.l.b16 %v947
    %v1080 = vunpack.c.l.b16 %v948
    %v1081 = vunpack.c.l.b16 %v949
    %v1082 = vunpack.c.l.b16 %v950
    %v1083 = vunpack.c.l.b16 %v951
    %v1084 = vunpack.c.l.b16 %v952
    %v1085 = vunpack.c.l.b16 %v953
    %v1086 = vunpack.c.l.b16 %v954
    %v1087 = vunpack.c.l.b16 %v955
    %v1088 = vunpack.c.l.b16 %v956
    %v1089 = vunpack.c.l.b16 %v957
    %v1090 = vunpack.c.l.b16 %v958
    %v1091 = vunpack.c.l.b16 %v959
    %v1092 = vunpack.c.l.b16 %v960
    %v1093 = vunpack.c.l.b16 %v961
    %v1094 = vunpack.c.l.b16 %v962
    %v1095 = vunpack.c.l.b16 %v963
    %v1096 = vunpack.c.l.b16 %v964
    %v1097 = vunpack.c.l.b16 %v965
    %v1098 = vunpack.c.l.b16 %v966
    %v1099 = vunpack.c.l.b16 %v967
    %v1100 = vunpack.c.l.b16 %v968
    %v1101 = vunpack.c.l.b16 %v969
    %v1102 = vunpack.c.l.b16 %v970
    %v1103 = vunpack.c.l.b16 %v971
    %v1104 = vunpack.c.l.b16 %v972
    %v1105 = vunpack.c.l.b16 %v973
    %v1106 = vunpack.c.l.b16 %v974
    %v1107 = vunpack.c.l.b16 %v975
    %v1108 = vunpack.c.l.b16 %v976
    %v1109 = vunpack.c.l.b16 %v977
    %v1110 = vunpack.c.l.b16 %v978
    %v1111 = vunpack.c.l.b16 %v979
    %v1112 = vunpack.c.l.b16 %v980
    %v1113 = vunpack.c.l.b16 %v981
    %v1114 = vunpack.c.l.b16 %v982
    %v1115 = vunpack.c.l.b16 %v983
    %v1116 = vunpack.c.l.b16 %v984
    %v1117 = vunpack.c.l.b16 %v985
    %v1118 = vunpack.c.l.b16 %v986
    %v1119 = vunpack.c.l.b16 %v987
    %v1120 = vunpack.c.l.b16 %v988
    %v1121 = vunpack.c.l.b16 %v989
    %v1122 = vunpack.c.l.b16 %v990
    %v1123 = vunpack.c.l.b16 %v991
    %v1124 = vunpack.c.l.b16 %v992
    %v1125 = vunpack.c.l.b16 %v993
    %v1126 = vunpack.c.l.b16 %v994
    %v1127 = vunpack.c.l.b16 %v995
    %v1128 = vpack.c.b16 %v1065, %v1064
    %v1129 = vpack.c.b16 %v1067, %v1066
    %v1130 = vpack.c.b16 %v1069, %v1068
    %v1131 = vpack.c.b16 %v1071, %v1070
    %v1132 = vpack.c.b16 %v1073, %v1072
    %v1133 = vpack.c.b16 %v1075, %v1074
    %v1134 = vpack.c.b16 %v1077, %v1076
    %v1135 = vpack.c.b16 %v1079, %v1078
    %v1136 = vpack.c.b16 %v1081, %v1080
    %v1137 = vpack.c.b16 %v1083, %v1082
    %v1138 = vpack.c.b16 %v1085, %v1084
    %v1139 = vpack.c.b16 %v1087, %v1086
    %v1140 = vpack.c.b16 %v1089, %v1088
    %v1141 = vpack.c.b16 %v1091, %v1090
    %v1142 = vpack.c.b16 %v1093, %v1092
    %v1143 = vpack.c.b16 %v1095, %v1094
    %v1144 = vpack.c.b16 %v1097, %v1096
    %v1145 = vpack.c.b16 %v1099, %v1098
    %v1146 = vpack.c.b16 %v1101, %v1100
    %v1147 = vpack.c.b16 %v1103, %v1102
    %v1148 = vpack.c.b16 %v1105, %v1104
    %v1149 = vpack.c.b16 %v1107, %v1106
    %v1150 = vpack.c.b16 %v1109, %v1108
    %v1151 = vpack.c.b16 %v1111, %v1110
    %v1152 = vpack.c.b16 %v1113, %v1112
    %v1153 = vpack.c.b16 %v1115, %v1114
    %v1154 = vpack.c.b16 %v1117, %v1116
    %v1155 = vpack.c.b16 %v1119, %v1118
    %v1156 = vpack.c.b16 %v1121, %v1120
    %v1157 = vpack.c.b16 %v1123, %v1122
    %v1158 = vpack.c.b16 %v1125, %v1124
    %v1159 = vpack.c.b16 %v1127, %v1126
    %1192 = vmatpush.bf16.msra.mxu0 %v1135
    %1193 = vmatpush.bf16.msra.mxu0 %v1134
    %1194 = vmatpush.bf16.msra.mxu0 %v1133
    %1195 = vmatpush.bf16.msra.mxu0 %v1132
    %1196 = vmatpush.bf16.msra.mxu0 %v1131
    %1197 = vmatpush.bf16.msra.mxu0 %v1130
    %1198 = vmatpush.bf16.msra.mxu0 %v1129
    %1199 = vmatpush.bf16.msra.mxu0 %v1128
    %1200 = vmatmul.bf16.gmra.mxu0 %v666
    %v1201 = vpop.f32.mrf.mxu0
    %v1202 = vadd.f32 %v998, %v1201
    %v1203 = vpop.f32.mrf.mxu0
    %1204 = vdwg.mxu0
    %1205 = vmatpush.bf16.msra.mxu0 %v1143
    %1206 = vmatpush.bf16.msra.mxu0 %v1142
    %1207 = vmatpush.bf16.msra.mxu0 %v1141
    %1208 = vmatpush.bf16.msra.mxu0 %v1140
    %1209 = vmatpush.bf16.msra.mxu0 %v1139
    %1210 = vmatpush.bf16.msra.mxu0 %v1138
    %1211 = vmatpush.bf16.msra.mxu0 %v1137
    %1212 = vmatpush.bf16.msra.mxu0 %v1136
    %1213 = vmatmul.bf16.gmra.mxu0 %v667
    %v1214 = vpop.f32.mrf.mxu0
    %v1215 = vadd.f32 %v1202, %v1214
    %v1216 = vpop.f32.mrf.mxu0
    %1217 = vdwg.mxu0
    %1218 = vmatpush.bf16.msra.mxu0 %v1151
    %1219 = vmatpush.bf16.msra.mxu0 %v1150
    %1220 = vmatpush.bf16.msra.mxu0 %v1149
    %1221 = vmatpush.bf16.msra.mxu0 %v1148
    %1222 = vmatpush.bf16.msra.mxu0 %v1147
    %1223 = vmatpush.bf16.msra.mxu0 %v1146
    %1224 = vmatpush.bf16.msra.mxu0 %v1145
    %1225 = vmatpush.bf16.msra.mxu0 %v1144
    %1226 = vmatmul.bf16.gmra.mxu0 %v668
    %v1227 = vpop.f32.mrf.mxu0
    %v1228 = vadd.f32 %v1215, %v1227
    %v1229 = vpop.f32.mrf.mxu0
    %1230 = vdwg.mxu0
    %1231 = vmatpush.bf16.msra.mxu0 %v1159
    %1232 = vmatpush.bf16.msra.mxu0 %v1158
    %1233 = vmatpush.bf16.msra.mxu0 %v1157
    %1234 = vmatpush.bf16.msra.mxu0 %v1156
    %1235 = vmatpush.bf16.msra.mxu0 %v1155
    %1236 = vmatpush.bf16.msra.mxu0 %v1154
    %1237 = vmatpush.bf16.msra.mxu0 %v1153
    %1238 = vmatpush.bf16.msra.mxu0 %v1152
    %1239 = vmatmul.bf16.gmra.mxu0 %v669
    %v1240 = vpop.f32.mrf.mxu0
    %v1241 = vadd.f32 %v1228, %v1240
    %v1242 = vpop.f32.mrf.mxu0
    %1243 = vdwg.mxu0
    %v1244 = vmax.f32 %v1241, 0.0
    %v1245 = vpack.c.bf16 %v1244, %v1244
    %1246 = vmatpush.bf16.msra.mxu0 %v1135
    %1247 = vmatpush.bf16.msra.mxu0 %v1134
    %1248 = vmatpush.bf16.msra.mxu0 %v1133
    %1249 = vmatpush.bf16.msra.mxu0 %v1132
    %1250 = vmatpush.bf16.msra.mxu0 %v1131
    %1251 = vmatpush.bf16.msra.mxu0 %v1130
    %1252 = vmatpush.bf16.msra.mxu0 %v1129
    %1253 = vmatpush.bf16.msra.mxu0 %v1128
    %1254 = vmatmul.bf16.gmra.mxu0 %v928
    %v1255 = vpop.f32.mrf.mxu0
    %v1256 = vadd.f32 %v998, %v1255
    %v1257 = vpop.f32.mrf.mxu0
    %1258 = vdwg.mxu0
    %1259 = vmatpush.bf16.msra.mxu0 %v1143
    %1260 = vmatpush.bf16.msra.mxu0 %v1142
    %1261 = vmatpush.bf16.msra.mxu0 %v1141
    %1262 = vmatpush.bf16.msra.mxu0 %v1140
    %1263 = vmatpush.bf16.msra.mxu0 %v1139
    %1264 = vmatpush.bf16.msra.mxu0 %v1138
    %1265 = vmatpush.bf16.msra.mxu0 %v1137
    %1266 = vmatpush.bf16.msra.mxu0 %v1136
    %1267 = vmatmul.bf16.gmra.mxu0 %v929
    %v1268 = vpop.f32.mrf.mxu0
    %v1269 = vadd.f32 %v1256, %v1268
    %v1270 = vpop.f32.mrf.mxu0
    %1271 = vdwg.mxu0
    %1272 = vmatpush.bf16.msra.mxu0 %v1151
    %1273 = vmatpush.bf16.msra.mxu0 %v1150
    %1274 = vmatpush.bf16.msra.mxu0 %v1149
    %1275 = vmatpush.bf16.msra.mxu0 %v1148
    %1276 = vmatpush.bf16.msra.mxu0 %v1147
    %1277 = vmatpush.bf16.msra.mxu0 %v1146
    %1278 = vmatpush.bf16.msra.mxu0 %v1145
    %1279 = vmatpush.bf16.msra.mxu0 %v1144
    %1280 = vmatmul.bf16.gmra.mxu0 %v930
    %v1281 = vpop.f32.mrf.mxu0
    %v1282 = vadd.f32 %v1269, %v1281
    %v1283 = vpop.f32.mrf.mxu0
    %1284 = vdwg.mxu0
    %1285 = vmatpush.bf16.msra.mxu0 %v1159
    %1286 = vmatpush.bf16.msra.mxu0 %v1158
    %1287 = vmatpush.bf16.msra.mxu0 %v1157
    %1288 = vmatpush.bf16.msra.mxu0 %v1156
    %1289 = vmatpush.bf16.msra.mxu0 %v1155
    %1290 = vmatpush.bf16.msra.mxu0 %v1154
    %1291 = vmatpush.bf16.msra.mxu0 %v1153
    %1292 = vmatpush.bf16.msra.mxu0 %v1152
    %1293 = vmatmul.bf16.gmra.mxu0 %v931
    %v1294 = vpop.f32.mrf.mxu0
    %v1295 = vadd.f32 %v1282, %v1294
    %v1296 = vpop.f32.mrf.mxu0
    %1297 = vdwg.mxu0
    %v1298 = vmax.f32 %v1295, 0.0
    %v1299 = vpack.c.bf16 %v1298, %v1298
    %v1300 = vld [vmem:[#allocation13] sm:$0xf]
    %v1301 = vld [vmem:[#allocation13 + $0x4] sm:$0xf]
    %v1302 = vld [vmem:[#allocation13 + $0x8] sm:$0xf]
    %v1303 = vld [vmem:[#allocation13 + $0xc] sm:$0xf]
    %v1304 = vld [vmem:[#allocation13 + $0x10] sm:$0xf]
    %v1305 = vld [vmem:[#allocation13 + $0x14] sm:$0xf]
    %v1306 = vld [vmem:[#allocation13 + $0x18] sm:$0xf]
    %v1307 = vld [vmem:[#allocation13 + $0x1c] sm:$0xf]
    %v1308 = vld [vmem:[#allocation13 + $0x20] sm:$0xf]
    %v1309 = vld [vmem:[#allocation13 + $0x24] sm:$0xf]
    %v1310 = vld [vmem:[#allocation13 + $0x28] sm:$0xf]
    %v1311 = vld [vmem:[#allocation13 + $0x2c] sm:$0xf]
    %v1312 = vld [vmem:[#allocation13 + $0x30] sm:$0xf]
    %v1313 = vld [vmem:[#allocation13 + $0x34] sm:$0xf]
    %v1314 = vld [vmem:[#allocation13 + $0x38] sm:$0xf]
    %v1315 = vld [vmem:[#allocation13 + $0x3c] sm:$0xf]
    %v1316 = vld [vmem:[#allocation14] sm:$0xf]
    %v1317 = vld [vmem:[#allocation14 + $0x4] sm:$0xf]
    %v1318 = vld [vmem:[#allocation14 + $0x8] sm:$0xf]
    %v1319 = vld [vmem:[#allocation14 + $0xc] sm:$0xf]
    %v1320 = vld [vmem:[#allocation14 + $0x10] sm:$0xf]
    %v1321 = vld [vmem:[#allocation14 + $0x14] sm:$0xf]
    %v1322 = vld [vmem:[#allocation14 + $0x18] sm:$0xf]
    %v1323 = vld [vmem:[#allocation14 + $0x1c] sm:$0xf]
    %v1324 = vld [vmem:[#allocation14 + $0x20] sm:$0xf]
    %v1325 = vld [vmem:[#allocation14 + $0x24] sm:$0xf]
    %v1326 = vld [vmem:[#allocation14 + $0x28] sm:$0xf]
    %v1327 = vld [vmem:[#allocation14 + $0x2c] sm:$0xf]
    %v1328 = vld [vmem:[#allocation14 + $0x30] sm:$0xf]
    %v1329 = vld [vmem:[#allocation14 + $0x34] sm:$0xf]
    %v1330 = vld [vmem:[#allocation14 + $0x38] sm:$0xf]
    %v1331 = vld [vmem:[#allocation14 + $0x3c] sm:$0xf]
    %v1348 = vunpack.c.l.b16 %v1316
    %v1349 = vunpack.c.l.b16 %v1317
    %v1350 = vunpack.c.l.b16 %v1318
    %v1351 = vunpack.c.l.b16 %v1319
    %v1352 = vunpack.c.l.b16 %v1320
    %v1353 = vunpack.c.l.b16 %v1321
    %v1354 = vunpack.c.l.b16 %v1322
    %v1355 = vunpack.c.l.b16 %v1323
    %v1356 = vunpack.c.l.b16 %v1324
    %v1357 = vunpack.c.l.b16 %v1325
    %v1358 = vunpack.c.l.b16 %v1326
    %v1359 = vunpack.c.l.b16 %v1327
    %v1360 = vunpack.c.l.b16 %v1328
    %v1361 = vunpack.c.l.b16 %v1329
    %v1362 = vunpack.c.l.b16 %v1330
    %v1363 = vunpack.c.l.b16 %v1331
    %v1364 = vpack.c.b16 %v1349, %v1348
    %v1365 = vpack.c.b16 %v1351, %v1350
    %v1366 = vpack.c.b16 %v1353, %v1352
    %v1367 = vpack.c.b16 %v1355, %v1354
    %v1368 = vpack.c.b16 %v1357, %v1356
    %v1369 = vpack.c.b16 %v1359, %v1358
    %v1370 = vpack.c.b16 %v1361, %v1360
    %v1371 = vpack.c.b16 %v1363, %v1362
    %1380 = vmatpush.bf16.msra.mxu0 %v1371
    %1381 = vmatpush.bf16.msra.mxu0 %v1370
    %1382 = vmatpush.bf16.msra.mxu0 %v1369
    %1383 = vmatpush.bf16.msra.mxu0 %v1368
    %1384 = vmatpush.bf16.msra.mxu0 %v1367
    %1385 = vmatpush.bf16.msra.mxu0 %v1366
    %1386 = vmatpush.bf16.msra.mxu0 %v1365
    %1387 = vmatpush.bf16.msra.mxu0 %v1364
    %1388 = vmatmul.bf16.gmra.mxu0 %v1299
    %v1389 = vpop.f32.mrf.mxu0
    %v1390 = vadd.f32 0.0, %v1389
    %v1391 = vpop.f32.mrf.mxu0
    %1392 = vdwg.mxu0
    %v1409 = vunpack.c.l.b16 %v1300
    %v1410 = vunpack.c.l.b16 %v1301
    %v1411 = vunpack.c.l.b16 %v1302
    %v1412 = vunpack.c.l.b16 %v1303
    %v1413 = vunpack.c.l.b16 %v1304
    %v1414 = vunpack.c.l.b16 %v1305
    %v1415 = vunpack.c.l.b16 %v1306
    %v1416 = vunpack.c.l.b16 %v1307
    %v1417 = vunpack.c.l.b16 %v1308
    %v1418 = vunpack.c.l.b16 %v1309
    %v1419 = vunpack.c.l.b16 %v1310
    %v1420 = vunpack.c.l.b16 %v1311
    %v1421 = vunpack.c.l.b16 %v1312
    %v1422 = vunpack.c.l.b16 %v1313
    %v1423 = vunpack.c.l.b16 %v1314
    %v1424 = vunpack.c.l.b16 %v1315
    %v1425 = vpack.c.b16 %v1410, %v1409
    %v1426 = vpack.c.b16 %v1412, %v1411
    %v1427 = vpack.c.b16 %v1414, %v1413
    %v1428 = vpack.c.b16 %v1416, %v1415
    %v1429 = vpack.c.b16 %v1418, %v1417
    %v1430 = vpack.c.b16 %v1420, %v1419
    %v1431 = vpack.c.b16 %v1422, %v1421
    %v1432 = vpack.c.b16 %v1424, %v1423
    %1441 = vmatpush.bf16.msra.mxu0 %v1432
    %1442 = vmatpush.bf16.msra.mxu0 %v1431
    %1443 = vmatpush.bf16.msra.mxu0 %v1430
    %1444 = vmatpush.bf16.msra.mxu0 %v1429
    %1445 = vmatpush.bf16.msra.mxu0 %v1428
    %1446 = vmatpush.bf16.msra.mxu0 %v1427
    %1447 = vmatpush.bf16.msra.mxu0 %v1426
    %1448 = vmatpush.bf16.msra.mxu0 %v1425
    %1449 = vmatmul.bf16.gmra.mxu0 %v1245
    %v1450 = vpop.f32.mrf.mxu0
    %v1451 = vadd.f32 %v1390, %v1450
    %v1452 = vpop.f32.mrf.mxu0
    %1453 = vdwg.mxu0
    %v1454 = vld [vmem:[%s10] sm:$0x1]
    %v1456 = vperm.slane %v1454, 0
    %v1458 = vadd.f32 %v1451, %v1456
    %1459 = vst [vmem:[#allocation16] sm:$0xff] %v1458
    // Predicated region
    $region78: #{tpu_custom_call.1} parent=1 // pred_check
      _
    $region79: #{tpu_custom_call.1} parent=1 // pred_check_branch
      %1461 = sbr.rel (0) target = $region81
    $region80: #{tpu_custom_call.1} parent=1 // pred_region
      %1463 = vsyncadd [#allocation4], 0
      %s1465 = sshll.u32 [#allocation16], 4
      %s1466 = int_to_ptr.vmem [resolvable:$true] %s1465
      %s1467 = sshll.u32 %s11, 4
      %s1468 = int_to_ptr.hbm [resolvable:$true] %s1467
      %1470 = dma.vmem_to_hbm [thread:$0]  %s1466, 128, %s1468, [#allocation4]
    $region81: #{tpu_custom_call.1} parent=1 // pred_fallthru
      _
    // Predicated region
    $region82: #{tpu_custom_call.1} parent=1 // pred_check
      _
    $region83: #{tpu_custom_call.1} parent=1 // pred_check_branch
      %1472 = sbr.rel (0) target = $region85
    $region84: #{tpu_custom_call.1} parent=1 // pred_region
      %1474 = dma.done [#allocation4], 128
    $region85: #{tpu_custom_call.1} parent=1 // pred_fallthru
      _
    %1475 = vsyncpa [#allocation3], 1
    %1476 = vsyncpa [#allocation6], 1
    %1477 = vsyncpa [#allocation9], 1
    %1478 = vsyncpa [#allocation12], 1
    %1479 = vsyncpa [#allocation15], 1
    %1480 = vsyncpa [#allocation4], 1

</llo_original>
